<compile_context>
chip_gen: v6e
topology: v6e:2x2x1
jax: 0.10.0
libtpu: 0.0.40
codegen_flags: <defaults>
</compile_context>

<pallas_src>
import functools

import jax
import jax.numpy as jnp
from jax.experimental import pallas as pl
from jax.experimental.pallas import tpu as pltpu


_PAD = 4      # (9 - 1) // 2 zeros of padding on each side of the time axis
_HALO = 128   # lane-aligned halo block width (multiple of 128, >= _PAD)


def _create_filters():
    """Python mirror of Delta._create_filters(); returns 3 lists of length 9."""
    scales = [[1.0]]
    for i in range(1, 3):
        prev_offset = (len(scales[i - 1]) - 1) // 2
        offset = prev_offset + 2
        current = [0.0] * (len(scales[i - 1]) + 2 * 2)
        normalizer = 0.0
        for j in range(-2, 2 + 1):
            normalizer += j * j
            for k in range(-prev_offset, prev_offset + 1):
                current[k + offset + j] += j * scales[i - 1][k + prev_offset]
        current = [x / normalizer for x in current]
        scales.append(current)
    max_len = len(scales[-1])
    for i, scale in enumerate(scales[:-1]):
        padding = (max_len - len(scale)) // 2
        scales[i] = [0.0] * padding + scale + [0.0] * padding
    return scales  # 3 filters of 9 taps each


def _make_delta_kernel(filters, F, t_tile):
    """Kernel body with filter taps baked in as scalar constants."""
    base = _HALO - _PAD  # scratch column corresponding to tap k=0 at output col 0

    nonzero = []
    for c in range(3):
        nonzero.append([(k, float(w)) for k, w in enumerate(filters[c])
                        if float(w) != 0.0])

    def kernel(xc_ref, xl_ref, xr_ref, o_ref, buf_ref):
        # xc_ref: (F, t_tile) center tile (un-padded input)
        # xl_ref/xr_ref: (F, 128) lane-aligned blocks adjacent to the tile
        # o_ref: (3, F, t_tile); buf_ref: (F, t_tile + 2*128) VMEM scratch
        t = pl.program_id(1)
        nt = pl.num_programs(1)

        # Assemble contiguous window covering global time
        # [t*t_tile - 128, (t+1)*t_tile + 128); all stores are lane-aligned.
        buf_ref[:, _HALO:_HALO + t_tile] = xc_ref[...].astype(jnp.float32)

        @pl.when(t == 0)
        def _():  # zero left halo (matches conv2d zero padding)
            buf_ref[:, 0:_HALO] = jnp.zeros((F, _HALO), jnp.float32)

        @pl.when(t > 0)
        def _():
            buf_ref[:, 0:_HALO] = xl_ref[...].astype(jnp.float32)

        @pl.when(t == nt - 1)
        def _():  # zero right halo
            buf_ref[:, _HALO + t_tile:] = jnp.zeros((F, _HALO), jnp.float32)

        @pl.when(t < nt - 1)
        def _():
            buf_ref[:, _HALO + t_tile:] = xr_ref[...].astype(jnp.float32)

        # Channel 0: identity tap -> straight lane-dense copy of the tile.
        o_ref[0, :, :] = xc_ref[...].astype(o_ref.dtype)

        # Channels 1-2: FIR over shifted slices read directly from VMEM.
        for c in (1, 2):
            taps = nonzero[c]
            k0, w0 = taps[0]
            acc = w0 * buf_ref[:, base + k0:base + k0 + t_tile]
            for k, w in taps[1:]:
                acc = acc + w * buf_ref[:, base + k:base + k + t_tile]
            o_ref[c, :, :] = acc.astype(o_ref.dtype)

    return kernel


def _choose_t_tile(n_blocks, max_blocks):
    """Largest divisor of n_blocks that is <= max_blocks, in 128-lane blocks."""
    best = 1
    for d in range(1, min(n_blocks, max_blocks) + 1):
        if n_blocks % d == 0:
            best = d
    return best * 128


@functools.partial(jax.jit, static_argnames=("t_tile_max",))
def delta_forward(xs, t_tile_max=1024):
    """xs: (B, F, T) float32 -> (B, 3, F, T) float32."""
    B, F, T = xs.shape
    filters = _create_filters()

    # Round T up to a lane multiple only if needed (tail zeros reproduce the
    # conv2d zero-padding semantics for the last real columns; sliced off
    # again below).  No full-tensor pad on the common multiple-of-128 path.
    Tp = ((T + 127) // 128) * 128
    xs_p = xs if Tp == T else jnp.pad(xs, ((0, 0), (0, 0), (0, Tp - T)))

    n_blocks = Tp // 128
    t_tile = _choose_t_tile(n_blocks, max(1, t_tile_max // 128))
    nblk = t_tile // 128
    nt = Tp // t_tile

    kernel = _make_delta_kernel(filters, F, t_tile)

    def center_map(b, t):
        return (b, 0, t)

    def left_map(b, t):
        # 128-block just left of the tile; clamped (zeroed in-kernel at t==0).
        return (b, 0, jnp.maximum(t * nblk - 1, 0))

    def right_map(b, t):
        # 128-block just right of the tile; clamped (zeroed at the last tile).
        return (b, 0, jnp.minimum((t + 1) * nblk, n_blocks - 1))

    out = pl.pallas_call(
        kernel,
        out_shape=jax.ShapeDtypeStruct((B, 3, F, Tp), xs.dtype),
        grid_spec=pltpu.PrefetchScalarGridSpec(
            num_scalar_prefetch=0,
            grid=(B, nt),
            in_specs=[
                pl.BlockSpec((pl.Squeezed(), F, t_tile), center_map),
                pl.BlockSpec((pl.Squeezed(), F, _HALO), left_map),
                pl.BlockSpec((pl.Squeezed(), F, _HALO), right_map),
            ],
            out_specs=pl.BlockSpec(
                (pl.Squeezed(), 3, F, t_tile), lambda b, t: (b, 0, 0, t)
            ),
            scratch_shapes=[pltpu.VMEM((F, t_tile + 2 * _HALO), jnp.float32)],
        ),
        compiler_params=pltpu.CompilerParams(
            dimension_semantics=("parallel", "parallel"),
            vmem_limit_bytes=32 * 1024 * 1024,
        ),
    )(xs_p, xs_p, xs_p)

    if Tp != T:
        out = out[..., :T]
    return out
    # TODO(synk): for very small F (< 8 rows) fold a batch tile into the block
    # to avoid skinny DMAs; not needed for typical 80-bin mel features.


def _reference(xs):
    """Plain-JAX reference (same FIR math) for correctness checking."""
    B, F, T = xs.shape
    filters = _create_filters()
    K = len(filters[0])
    pad = (K - 1) // 2
    x_pad = jnp.pad(xs, ((0, 0), (0, 0), (pad, pad)))
    outs = []
    for c in range(3):
        acc = jnp.zeros((B, F, T), jnp.float32)
        for k in range(K):
            acc = acc + filters[c][k] * x_pad[:, :, k:k + T]
        outs.append(acc)
    return jnp.stack(outs, axis=1)


if __name__ == "__main__":
    key = jax.random.PRNGKey(0)

    # Multi-tile path: T not a multiple of 128, small tile cap so the halo
    # stitching across time tiles and both edge cases are exercised.
    B, F, T = 2, 80, 2000
    xs = jax.random.normal(key, (B, F, T), dtype=jnp.float32)
    out = jax.block_until_ready(delta_forward(xs, t_tile_max=256))
    ref = _reference(xs)
    assert out.shape == (B, 3, F, T), out.shape
    assert jnp.allclose(out, ref, atol=1e-5, rtol=1e-5), "mismatch (tiled path)"

    # Tiny-sequence path (single tile, both halos zeroed).
    B2, F2, T2 = 2, 8, 16
    xs2 = jax.random.normal(jax.random.PRNGKey(0), (B2, F2, T2), dtype=jnp.float32)
    out2 = jax.block_until_ready(delta_forward(xs2))
    ref2 = _reference(xs2)
    assert out2.shape == (B2, 3, F2, T2), out2.shape
    assert jnp.allclose(out2, ref2, atol=1e-5, rtol=1e-5), "mismatch (tiny path)"

    print("KERNEL_OK")
</pallas_src>

<mosaic_0001>
module attributes {stable_mosaic.version = 11 : i64} {
  func.func @kernel(%arg0: i32, %arg1: i32, %arg2: memref<1x80x256xf32, #tpu.memory_space<vmem>>, %arg3: memref<1x80x128xf32, #tpu.memory_space<vmem>>, %arg4: memref<1x80x128xf32, #tpu.memory_space<vmem>>, %arg5: memref<1x3x80x256xf32, #tpu.memory_space<vmem>>, %arg6: memref<80x512xf32, #tpu.memory_space<vmem>>) attributes {dimension_semantics = [#tpu.dimension_semantics<parallel>, #tpu.dimension_semantics<parallel>], iteration_bounds = array<i64: 2, 8>, scalar_prefetch = 0 : i64, scratch_operands = 1 : i64, tpu.core_type = #tpu.core_type<tc>, window_params = [{transform_indices = @transform_0, window_bounds = array<i64: 1, 80, 256>}, {transform_indices = @transform_1, window_bounds = array<i64: 1, 80, 128>}, {transform_indices = @transform_2, window_bounds = array<i64: 1, 80, 128>}, {transform_indices = @transform_3, window_bounds = array<i64: 1, 3, 80, 256>}]} {
    %c0 = arith.constant 0 : index
    %c0_0 = arith.constant 0 : index
    %c0_1 = arith.constant 0 : index
    %0 = vector.load %arg2[%c0, %c0_0, %c0_1] : memref<1x80x256xf32, #tpu.memory_space<vmem>>, vector<1x80x256xf32>
    %1 = vector.shape_cast %0 : vector<1x80x256xf32> to vector<80x256xf32>
    %c0_2 = arith.constant 0 : index
    %c128 = arith.constant 128 : index
    %2 = vector.load %arg6[%c0_2, %c128] : memref<80x512xf32, #tpu.memory_space<vmem>>, vector<80x256xf32>
    tpu.vector_store %arg6[%c0_2, %c128], %1 {strides = array<i32>} : memref<80x512xf32, #tpu.memory_space<vmem>>, vector<80x256xf32>,
    %c0_i32 = arith.constant 0 : i32
    %3 = arith.cmpi eq, %arg1, %c0_i32 : i32
    %4 = arith.extui %3 : i1 to i32
    %c0_i32_3 = arith.constant 0 : i32
    %5 = arith.cmpi ne, %4, %c0_i32_3 : i32
    scf.if %5 {
      %cst_52 = arith.constant 0.000000e+00 : f32
      %76 = vector.broadcast %cst_52 : f32 to vector<80x128xf32>
      %c0_53 = arith.constant 0 : index
      %c0_54 = arith.constant 0 : index
      %77 = vector.load %arg6[%c0_53, %c0_54] : memref<80x512xf32, #tpu.memory_space<vmem>>, vector<80x128xf32>
      tpu.vector_store %arg6[%c0_53, %c0_54], %76 {strides = array<i32>} : memref<80x512xf32, #tpu.memory_space<vmem>>, vector<80x128xf32>,
    } else {
    }
    %c0_i32_4 = arith.constant 0 : i32
    %6 = arith.cmpi sgt, %arg1, %c0_i32_4 : i32
    %7 = arith.extui %6 : i1 to i32
    %c0_i32_5 = arith.constant 0 : i32
    %8 = arith.cmpi ne, %7, %c0_i32_5 : i32
    scf.if %8 {
      %c0_52 = arith.constant 0 : index
      %c0_53 = arith.constant 0 : index
      %c0_54 = arith.constant 0 : index
      %76 = vector.load %arg3[%c0_52, %c0_53, %c0_54] : memref<1x80x128xf32, #tpu.memory_space<vmem>>, vector<1x80x128xf32>
      %77 = vector.shape_cast %76 : vector<1x80x128xf32> to vector<80x128xf32>
      %c0_55 = arith.constant 0 : index
      %c0_56 = arith.constant 0 : index
      %78 = vector.load %arg6[%c0_55, %c0_56] : memref<80x512xf32, #tpu.memory_space<vmem>>, vector<80x128xf32>
      tpu.vector_store %arg6[%c0_55, %c0_56], %77 {strides = array<i32>} : memref<80x512xf32, #tpu.memory_space<vmem>>, vector<80x128xf32>,
    } else {
    }
    %c7_i32 = arith.constant 7 : i32
    %9 = arith.cmpi eq, %arg1, %c7_i32 : i32
    %10 = arith.extui %9 : i1 to i32
    %c0_i32_6 = arith.constant 0 : i32
    %11 = arith.cmpi ne, %10, %c0_i32_6 : i32
    scf.if %11 {
      %cst_52 = arith.constant 0.000000e+00 : f32
      %76 = vector.broadcast %cst_52 : f32 to vector<80x128xf32>
      %c0_53 = arith.constant 0 : index
      %c384 = arith.constant 384 : index
      %77 = vector.load %arg6[%c0_53, %c384] : memref<80x512xf32, #tpu.memory_space<vmem>>, vector<80x128xf32>
      tpu.vector_store %arg6[%c0_53, %c384], %76 {strides = array<i32>} : memref<80x512xf32, #tpu.memory_space<vmem>>, vector<80x128xf32>,
    } else {
    }
    %c7_i32_7 = arith.constant 7 : i32
    %12 = arith.cmpi slt, %arg1, %c7_i32_7 : i32
    %13 = arith.extui %12 : i1 to i32
    %c0_i32_8 = arith.constant 0 : i32
    %14 = arith.cmpi ne, %13, %c0_i32_8 : i32
    scf.if %14 {
      %c0_52 = arith.constant 0 : index
      %c0_53 = arith.constant 0 : index
      %c0_54 = arith.constant 0 : index
      %76 = vector.load %arg4[%c0_52, %c0_53, %c0_54] : memref<1x80x128xf32, #tpu.memory_space<vmem>>, vector<1x80x128xf32>
      %77 = vector.shape_cast %76 : vector<1x80x128xf32> to vector<80x128xf32>
      %c0_55 = arith.constant 0 : index
      %c384 = arith.constant 384 : index
      %78 = vector.load %arg6[%c0_55, %c384] : memref<80x512xf32, #tpu.memory_space<vmem>>, vector<80x128xf32>
      tpu.vector_store %arg6[%c0_55, %c384], %77 {strides = array<i32>} : memref<80x512xf32, #tpu.memory_space<vmem>>, vector<80x128xf32>,
    } else {
    }
    %c0_9 = arith.constant 0 : index
    %c0_10 = arith.constant 0 : index
    %c0_11 = arith.constant 0 : index
    %15 = vector.load %arg2[%c0_9, %c0_10, %c0_11] : memref<1x80x256xf32, #tpu.memory_space<vmem>>, vector<1x80x256xf32>
    %16 = vector.shape_cast %15 : vector<1x80x256xf32> to vector<80x256xf32>
    %c0_12 = arith.constant 0 : index
    %c0_13 = arith.constant 0 : index
    %c0_14 = arith.constant 0 : index
    %c0_15 = arith.constant 0 : index
    %17 = vector.load %arg5[%c0_12, %c0_13, %c0_14, %c0_15] : memref<1x3x80x256xf32, #tpu.memory_space<vmem>>, vector<1x1x80x256xf32>
    %18 = vector.shape_cast %17 : vector<1x1x80x256xf32> to vector<80x256xf32>
    %19 = vector.shape_cast %16 : vector<80x256xf32> to vector<1x1x80x256xf32>
    tpu.vector_store %arg5[%c0_12, %c0_13, %c0_14, %c0_15], %19 {strides = array<i32>} : memref<1x3x80x256xf32, #tpu.memory_space<vmem>>, vector<1x1x80x256xf32>,
    %c0_16 = arith.constant 0 : index
    %c126 = arith.constant 126 : index
    %20 = vector.load %arg6[%c0_16, %c126] : memref<80x512xf32, #tpu.memory_space<vmem>>, vector<80x256xf32>
    %cst = arith.constant -2.000000e-01 : f32
    %21 = vector.broadcast %cst : f32 to vector<80x256xf32>
    %22 = arith.mulf %21, %20 : vector<80x256xf32>
    %c0_17 = arith.constant 0 : index
    %c127 = arith.constant 127 : index
    %23 = vector.load %arg6[%c0_17, %c127] : memref<80x512xf32, #tpu.memory_space<vmem>>, vector<80x256xf32>
    %cst_18 = arith.constant -1.000000e-01 : f32
    %24 = vector.broadcast %cst_18 : f32 to vector<80x256xf32>
    %25 = arith.mulf %24, %23 : vector<80x256xf32>
    %26 = arith.addf %22, %25 : vector<80x256xf32>
    %c0_19 = arith.constant 0 : index
    %c129 = arith.constant 129 : index
    %27 = vector.load %arg6[%c0_19, %c129] : memref<80x512xf32, #tpu.memory_space<vmem>>, vector<80x256xf32>
    %cst_20 = arith.constant 1.000000e-01 : f32
    %28 = vector.broadcast %cst_20 : f32 to vector<80x256xf32>
    %29 = arith.mulf %28, %27 : vector<80x256xf32>
    %30 = arith.addf %26, %29 : vector<80x256xf32>
    %c0_21 = arith.constant 0 : index
    %c130 = arith.constant 130 : index
    %31 = vector.load %arg6[%c0_21, %c130] : memref<80x512xf32, #tpu.memory_space<vmem>>, vector<80x256xf32>
    %cst_22 = arith.constant 2.000000e-01 : f32
    %32 = vector.broadcast %cst_22 : f32 to vector<80x256xf32>
    %33 = arith.mulf %32, %31 : vector<80x256xf32>
    %34 = arith.addf %30, %33 : vector<80x256xf32>
    %c0_23 = arith.constant 0 : index
    %c1 = arith.constant 1 : index
    %c0_24 = arith.constant 0 : index
    %c0_25 = arith.constant 0 : index
    %35 = vector.load %arg5[%c0_23, %c1, %c0_24, %c0_25] : memref<1x3x80x256xf32, #tpu.memory_space<vmem>>, vector<1x1x80x256xf32>
    %36 = vector.shape_cast %35 : vector<1x1x80x256xf32> to vector<80x256xf32>
    %37 = vector.shape_cast %34 : vector<80x256xf32> to vector<1x1x80x256xf32>
    tpu.vector_store %arg5[%c0_23, %c1, %c0_24, %c0_25], %37 {strides = array<i32>} : memref<1x3x80x256xf32, #tpu.memory_space<vmem>>, vector<1x1x80x256xf32>,
    %c0_26 = arith.constant 0 : index
    %c124 = arith.constant 124 : index
    %38 = vector.load %arg6[%c0_26, %c124] : memref<80x512xf32, #tpu.memory_space<vmem>>, vector<80x256xf32>
    %cst_27 = arith.constant 4.000000e-02 : f32
    %39 = vector.broadcast %cst_27 : f32 to vector<80x256xf32>
    %40 = arith.mulf %39, %38 : vector<80x256xf32>
    %c0_28 = arith.constant 0 : index
    %c125 = arith.constant 125 : index
    %41 = vector.load %arg6[%c0_28, %c125] : memref<80x512xf32, #tpu.memory_space<vmem>>, vector<80x256xf32>
    %cst_29 = arith.constant 4.000000e-02 : f32
    %42 = vector.broadcast %cst_29 : f32 to vector<80x256xf32>
    %43 = arith.mulf %42, %41 : vector<80x256xf32>
    %44 = arith.addf %40, %43 : vector<80x256xf32>
    %c0_30 = arith.constant 0 : index
    %c126_31 = arith.constant 126 : index
    %45 = vector.load %arg6[%c0_30, %c126_31] : memref<80x512xf32, #tpu.memory_space<vmem>>, vector<80x256xf32>
    %cst_32 = arith.constant 0.00999999977 : f32
    %46 = vector.broadcast %cst_32 : f32 to vector<80x256xf32>
    %47 = arith.mulf %46, %45 : vector<80x256xf32>
    %48 = arith.addf %44, %47 : vector<80x256xf32>
    %c0_33 = arith.constant 0 : index
    %c127_34 = arith.constant 127 : index
    %49 = vector.load %arg6[%c0_33, %c127_34] : memref<80x512xf32, #tpu.memory_space<vmem>>, vector<80x256xf32>
    %cst_35 = arith.constant -4.000000e-02 : f32
    %50 = vector.broadcast %cst_35 : f32 to vector<80x256xf32>
    %51 = arith.mulf %50, %49 : vector<80x256xf32>
    %52 = arith.addf %48, %51 : vector<80x256xf32>
    %c0_36 = arith.constant 0 : index
    %c128_37 = arith.constant 128 : index
    %53 = vector.load %arg6[%c0_36, %c128_37] : memref<80x512xf32, #tpu.memory_space<vmem>>, vector<80x256xf32>
    %cst_38 = arith.constant -1.000000e-01 : f32
    %54 = vector.broadcast %cst_38 : f32 to vector<80x256xf32>
    %55 = arith.mulf %54, %53 : vector<80x256xf32>
    %56 = arith.addf %52, %55 : vector<80x256xf32>
    %c0_39 = arith.constant 0 : index
    %c129_40 = arith.constant 129 : index
    %57 = vector.load %arg6[%c0_39, %c129_40] : memref<80x512xf32, #tpu.memory_space<vmem>>, vector<80x256xf32>
    %cst_41 = arith.constant -4.000000e-02 : f32
    %58 = vector.broadcast %cst_41 : f32 to vector<80x256xf32>
    %59 = arith.mulf %58, %57 : vector<80x256xf32>
    %60 = arith.addf %56, %59 : vector<80x256xf32>
    %c0_42 = arith.constant 0 : index
    %c130_43 = arith.constant 130 : index
    %61 = vector.load %arg6[%c0_42, %c130_43] : memref<80x512xf32, #tpu.memory_space<vmem>>, vector<80x256xf32>
    %cst_44 = arith.constant 0.00999999977 : f32
    %62 = vector.broadcast %cst_44 : f32 to vector<80x256xf32>
    %63 = arith.mulf %62, %61 : vector<80x256xf32>
    %64 = arith.addf %60, %63 : vector<80x256xf32>
    %c0_45 = arith.constant 0 : index
    %c131 = arith.constant 131 : index
    %65 = vector.load %arg6[%c0_45, %c131] : memref<80x512xf32, #tpu.memory_space<vmem>>, vector<80x256xf32>
    %cst_46 = arith.constant 4.000000e-02 : f32
    %66 = vector.broadcast %cst_46 : f32 to vector<80x256xf32>
    %67 = arith.mulf %66, %65 : vector<80x256xf32>
    %68 = arith.addf %64, %67 : vector<80x256xf32>
    %c0_47 = arith.constant 0 : index
    %c132 = arith.constant 132 : index
    %69 = vector.load %arg6[%c0_47, %c132] : memref<80x512xf32, #tpu.memory_space<vmem>>, vector<80x256xf32>
    %cst_48 = arith.constant 4.000000e-02 : f32
    %70 = vector.broadcast %cst_48 : f32 to vector<80x256xf32>
    %71 = arith.mulf %70, %69 : vector<80x256xf32>
    %72 = arith.addf %68, %71 : vector<80x256xf32>
    %c0_49 = arith.constant 0 : index
    %c2 = arith.constant 2 : index
    %c0_50 = arith.constant 0 : index
    %c0_51 = arith.constant 0 : index
    %73 = vector.load %arg5[%c0_49, %c2, %c0_50, %c0_51] : memref<1x3x80x256xf32, #tpu.memory_space<vmem>>, vector<1x1x80x256xf32>
    %74 = vector.shape_cast %73 : vector<1x1x80x256xf32> to vector<80x256xf32>
    %75 = vector.shape_cast %72 : vector<80x256xf32> to vector<1x1x80x256xf32>
    tpu.vector_store %arg5[%c0_49, %c2, %c0_50, %c0_51], %75 {strides = array<i32>} : memref<1x3x80x256xf32, #tpu.memory_space<vmem>>, vector<1x1x80x256xf32>,
    return
  }
  func.func @transform_0(%arg0: i32, %arg1: i32) -> (i32, i32, i32) {
    %c0_i32 = arith.constant 0 : i32
    %c0_i32_0 = arith.constant 0 : i32
    return %arg0, %c0_i32, %arg1 : i32, i32, i32
  }
  func.func @transform_1(%arg0: i32, %arg1: i32) -> (i32, i32, i32) {
    %c2_i32 = arith.constant 2 : i32
    %0 = arith.muli %arg1, %c2_i32 : i32
    %c1_i32 = arith.constant 1 : i32
    %1 = arith.subi %0, %c1_i32 : i32
    %c0_i32 = arith.constant 0 : i32
    %2 = arith.maxsi %1, %c0_i32 : i32
    %c0_i32_0 = arith.constant 0 : i32
    %c0_i32_1 = arith.constant 0 : i32
    return %arg0, %c0_i32_0, %2 : i32, i32, i32
  }
  func.func @transform_2(%arg0: i32, %arg1: i32) -> (i32, i32, i32) {
    %c1_i32 = arith.constant 1 : i32
    %0 = arith.addi %arg1, %c1_i32 : i32
    %c2_i32 = arith.constant 2 : i32
    %1 = arith.muli %0, %c2_i32 : i32
    %c15_i32 = arith.constant 15 : i32
    %2 = arith.minsi %1, %c15_i32 : i32
    %c0_i32 = arith.constant 0 : i32
    %c0_i32_0 = arith.constant 0 : i32
    return %arg0, %c0_i32, %2 : i32, i32, i32
  }
  func.func @transform_3(%arg0: i32, %arg1: i32) -> (i32, i32, i32, i32) {
    %c0_i32 = arith.constant 0 : i32
    %c0_i32_0 = arith.constant 0 : i32
    %c0_i32_1 = arith.constant 0 : i32
    return %arg0, %c0_i32, %c0_i32_0, %arg1 : i32, i32, i32, i32
  }
}

</mosaic_0001>

<llo_original>
// kernel: delta_forward.1
$region0: #{delta_forward.1}
  #allocation0 [shape = 'u32[]', space=smem, size = 0x4, offset = 0x4, fixed_abs, tag = 'smem constant byte address 0x4 - core index']
  #allocation1 [shape = 'u32[144,128]{1,0:T(1,128)}', space=vmem, size = 0x12000, scoped, tag = 'internal scratch']
  #allocation2 [shape = 'f32[80,512]{1,0:T(8,128)}', space=vmem, size = 0x28000, scoped, tag = 'scratch operand']
  %s0 = inlined_call_operand.vmem [shape: f32[2,80,2048], index: 0, kind: input, shape index: {}, may-alias: {0,1,2}]
  %s1 = inlined_call_operand.vmem [shape: f32[2,80,2048], index: 1, kind: input, shape index: {}, may-alias: {0,1,2}]
  %s2 = inlined_call_operand.vmem [shape: f32[2,80,2048], index: 2, kind: input, shape index: {}, may-alias: {0,1,2}]
  %s3 = inlined_call_operand.hbm [shape: f32[2,3,80,2048], index: 3, kind: output, shape index: {}]
  %s4 = sld [smem:[#allocation0]]
  $region160: #{delta_forward.1} parent=0
    _
  %s6 = ssub.s32 1, %s4
  %s7 = scalar_select 0, %s6, %s4
  $region1: #{delta_forward.1} parent=0
    #allocation3 [shape = 'u8[163840]{0}', space=vmem, size = 0x28000, scoped, tag = 'input window, operand 0']
    #allocation4 [shape = 'u8[81920]{0}', space=vmem, size = 0x14000, scoped, tag = 'input window, operand 1']
    #allocation5 [shape = 'u8[81920]{0}', space=vmem, size = 0x14000, scoped, tag = 'input window, operand 2']
    #allocation6 [shape = 'u8[491520]{0}', space=vmem, size = 0x78000, scoped, tag = 'output window, operand 0']
    #allocation7 [shape = 's32[2]{0}', space=sflag, size = 0x8, scoped, tag = 'scoped memory for delta_forward.1']
    %8 = vsyncpa [#allocation7], 0
    %s9 = scalar_lea.sflag [#allocation7], 1
    %10 = vsyncpa %s9, 0
    loop: start=0, step=1, limit=18
    $region2: #{delta_forward.1} parent=1 // loop_pre_header
      _
    $region3: #{delta_forward.1} parent=1 // loop_header
      %s12 = sphi 0, %s16
      %p13 = scmp.ge.s32.totalorder %s12, 18
      %s19 = sphi 0, %s31
      %s20 = sphi 0, %s27
      %s21 = sphi 0, %s19
      %s22 = sphi 0, %s20
      %s23 = sphi 0, %s21
      %s24 = sphi 0, %s22
      %s36 = sphi 0, %s38
      %s39 = sphi 0, %s36
      %s40 = sphi 0, %s39
      %s56 = sphi 0, %s40
      %s72 = sphi 0, %s74
      %s75 = sphi 0, %s72
      %s76 = sphi 0, %s75
      %s92 = sphi 0, %s76
      %s108 = sphi 0, %s110
      %s111 = sphi 0, %s108
      %s112 = sphi 0, %s111
      %s128 = sphi 0, %s112
      %s136 = sphi 0, %s138
      %s139 = sphi 0, %s136
      %s140 = sphi 0, %s139
      %s156 = sphi 0, %s140
    $region4: #{delta_forward.1} parent=1 // loop_header_branch
      %15 = sbr.rel (%p13) target = $region8
    $region5: #{delta_forward.1} parent=1 // loop_body
      %s17 = ssub.s32 %s12, 1
      %s18 = ssub.s32 %s12, 2
      %s25 = sadd.s32 1, %s20
      %p26 = scmp.ge.s32.totalorder %s25, 8
      %s27 = scalar_select %p26, 0, %s25
      %s28 = sadd.s32 1, %s19
      %s29 = scalar_select %p26, %s28, %s19
      %p30 = scmp.ge.s32.totalorder %s29, 2
      %s31 = scalar_select %p30, 0, %s29
      %s32 = ssub.s32 %s19, %s31
      %s33 = ssub.s32 %s20, %s27
      %s34 = sor.u32 %s32, %s33
      %p35 = scmp.eq.s32.totalorder %s34, 0
      %s37 = sadd.s32 %s36, 1
      %s38 = scalar_select %p35, %s36, %s37
      %p41 = pneg %p35
      %p42 = scmp.eq.s32.totalorder %s12, 15
      %p43 = por %p41, %p42
      %p44 = scmp.ne.s32.totalorder %s36, %s39
      %p45 = scmp.eq.s32.totalorder %s12, 0
      %p46 = por %p44, %p45
      %p47 = scmp.ne.s32.totalorder %s36, %s39
      %p48 = scmp.eq.s32.totalorder %s17, 15
      %p49 = por %p47, %p48
      %p50 = scmp.ne.s32.totalorder %s39, %s40
      %p51 = scmp.eq.s32.totalorder %s17, 0
      %p52 = por %p50, %p51
      %p53 = scmp.ne.s32.totalorder %s39, %s40
      %p54 = scmp.eq.s32.totalorder %s18, 15
      %p55 = por %p53, %p54
      %p57 = scmp.ne.s32.totalorder %s40, %s56
      %p58 = scmp.eq.s32.totalorder %s18, 0
      %p59 = por %p57, %p58
      %s60 = smul.u32 %s20, 2
      %s61 = ssub.s32 %s60, 1
      %p62 = scmp.gt.s32.totalorder %s61, 0
      %s63 = scalar_select %p62, %s61, 0
      %s64 = smul.u32 %s27, 2
      %s65 = ssub.s32 %s64, 1
      %p66 = scmp.gt.s32.totalorder %s65, 0
      %s67 = scalar_select %p66, %s65, 0
      %s68 = ssub.s32 %s19, %s31
      %s69 = ssub.s32 %s63, %s67
      %s70 = sor.u32 %s68, %s69
      %p71 = scmp.eq.s32.totalorder %s70, 0
      %s73 = sadd.s32 %s72, 1
      %s74 = scalar_select %p71, %s72, %s73
      %p77 = pneg %p71
      %p78 = scmp.eq.s32.totalorder %s12, 15
      %p79 = por %p77, %p78
      %p80 = scmp.ne.s32.totalorder %s72, %s75
      %p81 = scmp.eq.s32.totalorder %s12, 0
      %p82 = por %p80, %p81
      %p83 = scmp.ne.s32.totalorder %s72, %s75
      %p84 = scmp.eq.s32.totalorder %s17, 15
      %p85 = por %p83, %p84
      %p86 = scmp.ne.s32.totalorder %s75, %s76
      %p87 = scmp.eq.s32.totalorder %s17, 0
      %p88 = por %p86, %p87
      %p89 = scmp.ne.s32.totalorder %s75, %s76
      %p90 = scmp.eq.s32.totalorder %s18, 15
      %p91 = por %p89, %p90
      %p93 = scmp.ne.s32.totalorder %s76, %s92
      %p94 = scmp.eq.s32.totalorder %s18, 0
      %p95 = por %p93, %p94
      %s96 = sadd.s32 %s20, 1
      %s97 = smul.u32 %s96, 2
      %p98 = scmp.lt.s32.totalorder %s97, 15
      %s99 = scalar_select %p98, %s97, 15
      %s100 = sadd.s32 %s27, 1
      %s101 = smul.u32 %s100, 2
      %p102 = scmp.lt.s32.totalorder %s101, 15
      %s103 = scalar_select %p102, %s101, 15
      %s104 = ssub.s32 %s19, %s31
      %s105 = ssub.s32 %s99, %s103
      %s106 = sor.u32 %s104, %s105
      %p107 = scmp.eq.s32.totalorder %s106, 0
      %s109 = sadd.s32 %s108, 1
      %s110 = scalar_select %p107, %s108, %s109
      %p113 = pneg %p107
      %p114 = scmp.eq.s32.totalorder %s12, 15
      %p115 = por %p113, %p114
      %p116 = scmp.ne.s32.totalorder %s108, %s111
      %p117 = scmp.eq.s32.totalorder %s12, 0
      %p118 = por %p116, %p117
      %p119 = scmp.ne.s32.totalorder %s108, %s111
      %p120 = scmp.eq.s32.totalorder %s17, 15
      %p121 = por %p119, %p120
      %p122 = scmp.ne.s32.totalorder %s111, %s112
      %p123 = scmp.eq.s32.totalorder %s17, 0
      %p124 = por %p122, %p123
      %p125 = scmp.ne.s32.totalorder %s111, %s112
      %p126 = scmp.eq.s32.totalorder %s18, 15
      %p127 = por %p125, %p126
      %p129 = scmp.ne.s32.totalorder %s112, %s128
      %p130 = scmp.eq.s32.totalorder %s18, 0
      %p131 = por %p129, %p130
      %s132 = ssub.s32 %s19, %s31
      %s133 = ssub.s32 %s20, %s27
      %s134 = sor.u32 %s132, %s133
      %p135 = scmp.eq.s32.totalorder %s134, 0
      %s137 = sadd.s32 %s136, 1
      %s138 = scalar_select %p135, %s136, %s137
      %p141 = pneg %p135
      %p142 = scmp.eq.s32.totalorder %s12, 15
      %p143 = por %p141, %p142
      %p144 = scmp.ne.s32.totalorder %s136, %s139
      %p145 = scmp.eq.s32.totalorder %s12, 0
      %p146 = por %p144, %p145
      %p147 = scmp.ne.s32.totalorder %s136, %s139
      %p148 = scmp.eq.s32.totalorder %s17, 15
      %p149 = por %p147, %p148
      %p150 = scmp.ne.s32.totalorder %s139, %s140
      %p151 = scmp.eq.s32.totalorder %s17, 0
      %p152 = por %p150, %p151
      %p153 = scmp.ne.s32.totalorder %s139, %s140
      %p154 = scmp.eq.s32.totalorder %s18, 15
      %p155 = por %p153, %p154
      %p157 = scmp.ne.s32.totalorder %s140, %s156
      %p158 = scmp.eq.s32.totalorder %s18, 0
      %p159 = por %p157, %p158
      %p160 = scmp.le.s32.totalorder 1, %s12
      %p161 = scmp.lt.s32.totalorder %s12, 17
      %p162 = pnand %p160, %p161
      %p163 = pneg %p162
      // Predicated region
      $region9: #{delta_forward.1} parent=5 // pred_check
        _
      $region10: #{delta_forward.1} parent=5 // pred_check_branch
        %165 = sbr.rel (%p162) target = $region12
      $region11: #{delta_forward.1} parent=5 // pred_region
        %s166 = ssub.s32 %s12, 1
      $region12: #{delta_forward.1} parent=5 // pred_fallthru
        _
      %p167 = scmp.lt.s32.totalorder %s12, 16
      // Predicated region
      $region13: #{delta_forward.1} parent=5 // pred_check
        %p168 = pneg %p167
      $region14: #{delta_forward.1} parent=5 // pred_check_branch
        %170 = sbr.rel (%p168) target = $region16
      $region15: #{delta_forward.1} parent=5 // pred_region
        // Predicated region
        $region17: #{delta_forward.1} parent=15 // pred_check
          %p171 = pneg %p46
        $region18: #{delta_forward.1} parent=15 // pred_check_branch
          %173 = sbr.rel (%p171) target = $region20
        $region19: #{delta_forward.1} parent=15 // pred_region
          %s174 = sand.u32 %s36, 1
          %s175 = sand.u32 %s36, 1
          %s176 = smul.addr %s175, 160
          %s177 = scalar_lea.vmem [#allocation3], %s176
          %s178 = smul.u32 2, %s20
          %s179 = smul.addr %s19, 160
          %s180 = sadd.s32 %s178, %s179
          %s181 = smul.addr %s180, 8
          %s182 = scalar_lea.vmem %s0, %s181
          // Predicated region
          $region21: #{delta_forward.1} parent=19 // pred_check
            _
          $region22: #{delta_forward.1} parent=19 // pred_check_branch
            %184 = sbr.rel (0) target = $region24
          $region23: #{delta_forward.1} parent=19 // pred_region
            // Predicated region
            $region25: #{delta_forward.1} parent=23 // pred_check
              _
            $region26: #{delta_forward.1} parent=23 // pred_check_branch
              %186 = sbr.rel (0) target = $region28
            $region27: #{delta_forward.1} parent=23 // pred_region
              loop: start=0, step=1, limit=1
              $region29: #{delta_forward.1} parent=27 // loop_pre_header
                _
              $region30: #{delta_forward.1} parent=27 // loop_header
                %s188 = sphi 0, %s192
                %p189 = scmp.ge.s32.totalorder %s188, 1
                %s193 = sphi %s182, %s182
                %s194 = sphi %s177, %s177
              $region31: #{delta_forward.1} parent=27 // loop_header_branch
                %191 = sbr.rel (%p189) target = $region35
              $region32: #{delta_forward.1} parent=27 // loop_body
                %v195 = vld [vmem:[%s193] sm:$0xff]
                %196 = vst [vmem:[%s194] sm:$0xff] %v195
                %v197 = vld [vmem:[%s193 + $0x8] sm:$0xff]
                %198 = vst [vmem:[%s194 + $0x8] sm:$0xff] %v197
                %v199 = vld [vmem:[%s193 + $0x80] sm:$0xff]
                %200 = vst [vmem:[%s194 + $0x10] sm:$0xff] %v199
                %v201 = vld [vmem:[%s193 + $0x88] sm:$0xff]
                %202 = vst [vmem:[%s194 + $0x18] sm:$0xff] %v201
                %v203 = vld [vmem:[%s193 + $0x100] sm:$0xff]
                %204 = vst [vmem:[%s194 + $0x20] sm:$0xff] %v203
                %v205 = vld [vmem:[%s193 + $0x108] sm:$0xff]
                %206 = vst [vmem:[%s194 + $0x28] sm:$0xff] %v205
                %v207 = vld [vmem:[%s193 + $0x180] sm:$0xff]
                %208 = vst [vmem:[%s194 + $0x30] sm:$0xff] %v207
                %v209 = vld [vmem:[%s193 + $0x188] sm:$0xff]
                %210 = vst [vmem:[%s194 + $0x38] sm:$0xff] %v209
                %v211 = vld [vmem:[%s193 + $0x200] sm:$0xff]
                %212 = vst [vmem:[%s194 + $0x40] sm:$0xff] %v211
                %v213 = vld [vmem:[%s193 + $0x208] sm:$0xff]
                %214 = vst [vmem:[%s194 + $0x48] sm:$0xff] %v213
                %v215 = vld [vmem:[%s193 + $0x280] sm:$0xff]
                %216 = vst [vmem:[%s194 + $0x50] sm:$0xff] %v215
                %v217 = vld [vmem:[%s193 + $0x288] sm:$0xff]
                %218 = vst [vmem:[%s194 + $0x58] sm:$0xff] %v217
                %v219 = vld [vmem:[%s193 + $0x300] sm:$0xff]
                %220 = vst [vmem:[%s194 + $0x60] sm:$0xff] %v219
                %v221 = vld [vmem:[%s193 + $0x308] sm:$0xff]
                %222 = vst [vmem:[%s194 + $0x68] sm:$0xff] %v221
                %v223 = vld [vmem:[%s193 + $0x380] sm:$0xff]
                %224 = vst [vmem:[%s194 + $0x70] sm:$0xff] %v223
                %v225 = vld [vmem:[%s193 + $0x388] sm:$0xff]
                %226 = vst [vmem:[%s194 + $0x78] sm:$0xff] %v225
                %v227 = vld [vmem:[%s193 + $0x400] sm:$0xff]
                %228 = vst [vmem:[%s194 + $0x80] sm:$0xff] %v227
                %v229 = vld [vmem:[%s193 + $0x408] sm:$0xff]
                %230 = vst [vmem:[%s194 + $0x88] sm:$0xff] %v229
                %v231 = vld [vmem:[%s193 + $0x480] sm:$0xff]
                %232 = vst [vmem:[%s194 + $0x90] sm:$0xff] %v231
                %v233 = vld [vmem:[%s193 + $0x488] sm:$0xff]
                %234 = vst [vmem:[%s194 + $0x98] sm:$0xff] %v233
              $region33: #{delta_forward.1} parent=27 // loop_footer
                %s192 = sadd.s32 1, %s188
              $region34: #{delta_forward.1} parent=27 // loop_footer_branch
                %187 = sbr.rel target = $region30
              $region35: #{delta_forward.1} parent=27 // loop_exit
                _
            $region28: #{delta_forward.1} parent=23 // pred_fallthru
              _
            // Predicated region
            $region36: #{delta_forward.1} parent=23 // pred_check
              _
            $region37: #{delta_forward.1} parent=23 // pred_check_branch
              %236 = sbr.rel target = $region39
            $region38: #{delta_forward.1} parent=23 // pred_region
              _
            $region39: #{delta_forward.1} parent=23 // pred_fallthru
              _
          $region24: #{delta_forward.1} parent=19 // pred_fallthru
            _
          %237 = vnop
        $region20: #{delta_forward.1} parent=15 // pred_fallthru
          _
        // Predicated region
        $region40: #{delta_forward.1} parent=15 // pred_check
          %p238 = pneg %p82
        $region41: #{delta_forward.1} parent=15 // pred_check_branch
          %240 = sbr.rel (%p238) target = $region43
        $region42: #{delta_forward.1} parent=15 // pred_region
          %s241 = sand.u32 %s72, 1
          %s242 = sand.u32 %s72, 1
          %s243 = smul.addr %s242, 80
          %s244 = scalar_lea.vmem [#allocation4], %s243
          %s245 = smul.u32 %s20, 2
          %s246 = ssub.s32 %s245, 1
          %p247 = scmp.gt.s32.totalorder %s246, 0
          %s248 = scalar_select %p247, %s246, 0
          %s249 = smul.addr %s19, 160
          %s250 = sadd.s32 %s248, %s249
          %s251 = smul.addr %s250, 8
          %s252 = scalar_lea.vmem %s1, %s251
          // Predicated region
          $region44: #{delta_forward.1} parent=42 // pred_check
            _
          $region45: #{delta_forward.1} parent=42 // pred_check_branch
            %254 = sbr.rel (0) target = $region47
          $region46: #{delta_forward.1} parent=42 // pred_region
            // Predicated region
            $region48: #{delta_forward.1} parent=46 // pred_check
              _
            $region49: #{delta_forward.1} parent=46 // pred_check_branch
              %256 = sbr.rel (0) target = $region51
            $region50: #{delta_forward.1} parent=46 // pred_region
              // Predicated region
              $region63: #{delta_forward.1} parent=50 // pred_check
                _
              $region64: #{delta_forward.1} parent=50 // pred_check_branch
                %290 = sbr.rel (0) target = $region66
              $region65: #{delta_forward.1} parent=50 // pred_region
                loop: start=0, step=1, limit=1
                $region67: #{delta_forward.1} parent=65 // loop_pre_header
                  _
                $region68: #{delta_forward.1} parent=65 // loop_header
                  %s292 = sphi 0, %s296
                  %p293 = scmp.ge.s32.totalorder %s292, 1
                  %s297 = sphi %s252, %s252
                  %s298 = sphi %s244, %s244
                $region69: #{delta_forward.1} parent=65 // loop_header_branch
                  %295 = sbr.rel (%p293) target = $region73
                $region70: #{delta_forward.1} parent=65 // loop_body
                  %v299 = vld [vmem:[%s297] sm:$0xff]
                  %300 = vst [vmem:[%s298] sm:$0xff] %v299
                  %v301 = vld [vmem:[%s297 + $0x80] sm:$0xff]
                  %302 = vst [vmem:[%s298 + $0x8] sm:$0xff] %v301
                  %v303 = vld [vmem:[%s297 + $0x100] sm:$0xff]
                  %304 = vst [vmem:[%s298 + $0x10] sm:$0xff] %v303
                  %v305 = vld [vmem:[%s297 + $0x180] sm:$0xff]
                  %306 = vst [vmem:[%s298 + $0x18] sm:$0xff] %v305
                  %v307 = vld [vmem:[%s297 + $0x200] sm:$0xff]
                  %308 = vst [vmem:[%s298 + $0x20] sm:$0xff] %v307
                  %v309 = vld [vmem:[%s297 + $0x280] sm:$0xff]
                  %310 = vst [vmem:[%s298 + $0x28] sm:$0xff] %v309
                  %v311 = vld [vmem:[%s297 + $0x300] sm:$0xff]
                  %312 = vst [vmem:[%s298 + $0x30] sm:$0xff] %v311
                  %v313 = vld [vmem:[%s297 + $0x380] sm:$0xff]
                  %314 = vst [vmem:[%s298 + $0x38] sm:$0xff] %v313
                  %v315 = vld [vmem:[%s297 + $0x400] sm:$0xff]
                  %316 = vst [vmem:[%s298 + $0x40] sm:$0xff] %v315
                  %v317 = vld [vmem:[%s297 + $0x480] sm:$0xff]
                  %318 = vst [vmem:[%s298 + $0x48] sm:$0xff] %v317
                $region71: #{delta_forward.1} parent=65 // loop_footer
                  %s296 = sadd.s32 1, %s292
                $region72: #{delta_forward.1} parent=65 // loop_footer_branch
                  %291 = sbr.rel target = $region68
                $region73: #{delta_forward.1} parent=65 // loop_exit
                  _
              $region66: #{delta_forward.1} parent=50 // pred_fallthru
                _
              // Predicated region
              $region74: #{delta_forward.1} parent=50 // pred_check
                _
              $region75: #{delta_forward.1} parent=50 // pred_check_branch
                %320 = sbr.rel target = $region77
              $region76: #{delta_forward.1} parent=50 // pred_region
                _
              $region77: #{delta_forward.1} parent=50 // pred_fallthru
                _
            $region51: #{delta_forward.1} parent=46 // pred_fallthru
              _
            // Predicated region
            $region52: #{delta_forward.1} parent=46 // pred_check
              _
            $region53: #{delta_forward.1} parent=46 // pred_check_branch
              %258 = sbr.rel target = $region55
            $region54: #{delta_forward.1} parent=46 // pred_region
              %s260 = ssub.s32 256, 1
              loop: start=0, step=1, limit=1
              $region56: #{delta_forward.1} parent=54 // loop_pre_header
                _
              $region57: #{delta_forward.1} parent=54 // loop_header
                %s262 = sphi 0, %s266
                %p263 = scmp.ge.s32.totalorder %s262, 1
                %s267 = sphi %s252, %s252
                %s268 = sphi %s244, %s244
              $region58: #{delta_forward.1} parent=54 // loop_header_branch
                %265 = sbr.rel (%p263) target = $region62
              $region59: #{delta_forward.1} parent=54 // loop_body
                %v269 = vld [vmem:[%s267] sm:%s260]
                %270 = vst [vmem:[%s268] sm:%s260] %v269
                %v271 = vld [vmem:[%s267 + $0x80] sm:%s260]
                %272 = vst [vmem:[%s268 + $0x8] sm:%s260] %v271
                %v273 = vld [vmem:[%s267 + $0x100] sm:%s260]
                %274 = vst [vmem:[%s268 + $0x10] sm:%s260] %v273
                %v275 = vld [vmem:[%s267 + $0x180] sm:%s260]
                %276 = vst [vmem:[%s268 + $0x18] sm:%s260] %v275
                %v277 = vld [vmem:[%s267 + $0x200] sm:%s260]
                %278 = vst [vmem:[%s268 + $0x20] sm:%s260] %v277
                %v279 = vld [vmem:[%s267 + $0x280] sm:%s260]
                %280 = vst [vmem:[%s268 + $0x28] sm:%s260] %v279
                %v281 = vld [vmem:[%s267 + $0x300] sm:%s260]
                %282 = vst [vmem:[%s268 + $0x30] sm:%s260] %v281
                %v283 = vld [vmem:[%s267 + $0x380] sm:%s260]
                %284 = vst [vmem:[%s268 + $0x38] sm:%s260] %v283
                %v285 = vld [vmem:[%s267 + $0x400] sm:%s260]
                %286 = vst [vmem:[%s268 + $0x40] sm:%s260] %v285
                %v287 = vld [vmem:[%s267 + $0x480] sm:%s260]
                %288 = vst [vmem:[%s268 + $0x48] sm:%s260] %v287
              $region60: #{delta_forward.1} parent=54 // loop_footer
                %s266 = sadd.s32 1, %s262
              $region61: #{delta_forward.1} parent=54 // loop_footer_branch
                %261 = sbr.rel target = $region57
              $region62: #{delta_forward.1} parent=54 // loop_exit
                _
            $region55: #{delta_forward.1} parent=46 // pred_fallthru
              _
          $region47: #{delta_forward.1} parent=42 // pred_fallthru
            _
          %321 = vnop
        $region43: #{delta_forward.1} parent=15 // pred_fallthru
          _
        // Predicated region
        $region78: #{delta_forward.1} parent=15 // pred_check
          %p322 = pneg %p118
        $region79: #{delta_forward.1} parent=15 // pred_check_branch
          %324 = sbr.rel (%p322) target = $region81
        $region80: #{delta_forward.1} parent=15 // pred_region
          %s325 = sand.u32 %s108, 1
          %s326 = sand.u32 %s108, 1
          %s327 = smul.addr %s326, 80
          %s328 = scalar_lea.vmem [#allocation5], %s327
          %s329 = sadd.s32 %s20, 1
          %s330 = smul.u32 %s329, 2
          %p331 = scmp.lt.s32.totalorder %s330, 15
          %s332 = scalar_select %p331, %s330, 15
          %s333 = smul.addr %s19, 160
          %s334 = sadd.s32 %s332, %s333
          %s335 = smul.addr %s334, 8
          %s336 = scalar_lea.vmem %s2, %s335
          // Predicated region
          $region82: #{delta_forward.1} parent=80 // pred_check
            _
          $region83: #{delta_forward.1} parent=80 // pred_check_branch
            %338 = sbr.rel (0) target = $region85
          $region84: #{delta_forward.1} parent=80 // pred_region
            // Predicated region
            $region86: #{delta_forward.1} parent=84 // pred_check
              _
            $region87: #{delta_forward.1} parent=84 // pred_check_branch
              %340 = sbr.rel (0) target = $region89
            $region88: #{delta_forward.1} parent=84 // pred_region
              // Predicated region
              $region101: #{delta_forward.1} parent=88 // pred_check
                _
              $region102: #{delta_forward.1} parent=88 // pred_check_branch
                %374 = sbr.rel (0) target = $region104
              $region103: #{delta_forward.1} parent=88 // pred_region
                loop: start=0, step=1, limit=1
                $region105: #{delta_forward.1} parent=103 // loop_pre_header
                  _
                $region106: #{delta_forward.1} parent=103 // loop_header
                  %s376 = sphi 0, %s380
                  %p377 = scmp.ge.s32.totalorder %s376, 1
                  %s381 = sphi %s336, %s336
                  %s382 = sphi %s328, %s328
                $region107: #{delta_forward.1} parent=103 // loop_header_branch
                  %379 = sbr.rel (%p377) target = $region111
                $region108: #{delta_forward.1} parent=103 // loop_body
                  %v383 = vld [vmem:[%s381] sm:$0xff]
                  %384 = vst [vmem:[%s382] sm:$0xff] %v383
                  %v385 = vld [vmem:[%s381 + $0x80] sm:$0xff]
                  %386 = vst [vmem:[%s382 + $0x8] sm:$0xff] %v385
                  %v387 = vld [vmem:[%s381 + $0x100] sm:$0xff]
                  %388 = vst [vmem:[%s382 + $0x10] sm:$0xff] %v387
                  %v389 = vld [vmem:[%s381 + $0x180] sm:$0xff]
                  %390 = vst [vmem:[%s382 + $0x18] sm:$0xff] %v389
                  %v391 = vld [vmem:[%s381 + $0x200] sm:$0xff]
                  %392 = vst [vmem:[%s382 + $0x20] sm:$0xff] %v391
                  %v393 = vld [vmem:[%s381 + $0x280] sm:$0xff]
                  %394 = vst [vmem:[%s382 + $0x28] sm:$0xff] %v393
                  %v395 = vld [vmem:[%s381 + $0x300] sm:$0xff]
                  %396 = vst [vmem:[%s382 + $0x30] sm:$0xff] %v395
                  %v397 = vld [vmem:[%s381 + $0x380] sm:$0xff]
                  %398 = vst [vmem:[%s382 + $0x38] sm:$0xff] %v397
                  %v399 = vld [vmem:[%s381 + $0x400] sm:$0xff]
                  %400 = vst [vmem:[%s382 + $0x40] sm:$0xff] %v399
                  %v401 = vld [vmem:[%s381 + $0x480] sm:$0xff]
                  %402 = vst [vmem:[%s382 + $0x48] sm:$0xff] %v401
                $region109: #{delta_forward.1} parent=103 // loop_footer
                  %s380 = sadd.s32 1, %s376
                $region110: #{delta_forward.1} parent=103 // loop_footer_branch
                  %375 = sbr.rel target = $region106
                $region111: #{delta_forward.1} parent=103 // loop_exit
                  _
              $region104: #{delta_forward.1} parent=88 // pred_fallthru
                _
              // Predicated region
              $region112: #{delta_forward.1} parent=88 // pred_check
                _
              $region113: #{delta_forward.1} parent=88 // pred_check_branch
                %404 = sbr.rel target = $region115
              $region114: #{delta_forward.1} parent=88 // pred_region
                _
              $region115: #{delta_forward.1} parent=88 // pred_fallthru
                _
            $region89: #{delta_forward.1} parent=84 // pred_fallthru
              _
            // Predicated region
            $region90: #{delta_forward.1} parent=84 // pred_check
              _
            $region91: #{delta_forward.1} parent=84 // pred_check_branch
              %342 = sbr.rel target = $region93
            $region92: #{delta_forward.1} parent=84 // pred_region
              %s344 = ssub.s32 256, 1
              loop: start=0, step=1, limit=1
              $region94: #{delta_forward.1} parent=92 // loop_pre_header
                _
              $region95: #{delta_forward.1} parent=92 // loop_header
                %s346 = sphi 0, %s350
                %p347 = scmp.ge.s32.totalorder %s346, 1
                %s351 = sphi %s336, %s336
                %s352 = sphi %s328, %s328
              $region96: #{delta_forward.1} parent=92 // loop_header_branch
                %349 = sbr.rel (%p347) target = $region100
              $region97: #{delta_forward.1} parent=92 // loop_body
                %v353 = vld [vmem:[%s351] sm:%s344]
                %354 = vst [vmem:[%s352] sm:%s344] %v353
                %v355 = vld [vmem:[%s351 + $0x80] sm:%s344]
                %356 = vst [vmem:[%s352 + $0x8] sm:%s344] %v355
                %v357 = vld [vmem:[%s351 + $0x100] sm:%s344]
                %358 = vst [vmem:[%s352 + $0x10] sm:%s344] %v357
                %v359 = vld [vmem:[%s351 + $0x180] sm:%s344]
                %360 = vst [vmem:[%s352 + $0x18] sm:%s344] %v359
                %v361 = vld [vmem:[%s351 + $0x200] sm:%s344]
                %362 = vst [vmem:[%s352 + $0x20] sm:%s344] %v361
                %v363 = vld [vmem:[%s351 + $0x280] sm:%s344]
                %364 = vst [vmem:[%s352 + $0x28] sm:%s344] %v363
                %v365 = vld [vmem:[%s351 + $0x300] sm:%s344]
                %366 = vst [vmem:[%s352 + $0x30] sm:%s344] %v365
                %v367 = vld [vmem:[%s351 + $0x380] sm:%s344]
                %368 = vst [vmem:[%s352 + $0x38] sm:%s344] %v367
                %v369 = vld [vmem:[%s351 + $0x400] sm:%s344]
                %370 = vst [vmem:[%s352 + $0x40] sm:%s344] %v369
                %v371 = vld [vmem:[%s351 + $0x480] sm:%s344]
                %372 = vst [vmem:[%s352 + $0x48] sm:%s344] %v371
              $region98: #{delta_forward.1} parent=92 // loop_footer
                %s350 = sadd.s32 1, %s346
              $region99: #{delta_forward.1} parent=92 // loop_footer_branch
                %345 = sbr.rel target = $region95
              $region100: #{delta_forward.1} parent=92 // loop_exit
                _
            $region93: #{delta_forward.1} parent=84 // pred_fallthru
              _
          $region85: #{delta_forward.1} parent=80 // pred_fallthru
            _
          %405 = vnop
        $region81: #{delta_forward.1} parent=15 // pred_fallthru
          _
      $region16: #{delta_forward.1} parent=5 // pred_fallthru
        _
      %p406 = scmp.le.s32.totalorder 1, %s12
      %p407 = scmp.lt.s32.totalorder %s12, 17
      %p408 = pnand %p406, %p407
      %p409 = pneg %p408
      // Predicated region
      $region116: #{delta_forward.1} parent=5 // pred_check
        _
      $region117: #{delta_forward.1} parent=5 // pred_check_branch
        %411 = sbr.rel (%p408) target = $region119
      $region118: #{delta_forward.1} parent=5 // pred_region
        %s412 = ssub.s32 %s12, 1
        %s413 = sand.u32 %s39, 1
        %s414 = sand.u32 %s39, 1
        %s415 = smul.addr %s414, 160
        %s416 = scalar_lea.vmem [#allocation3], %s415
        // Predicated region
        $region120: #{delta_forward.1} parent=118 // pred_check
          %p417 = pneg %p52
        $region121: #{delta_forward.1} parent=118 // pred_check_branch
          %419 = sbr.rel (%p417) target = $region123
        $region122: #{delta_forward.1} parent=118 // pred_region
          _
        $region123: #{delta_forward.1} parent=118 // pred_fallthru
          _
        %s420 = sand.u32 %s75, 1
        %s421 = sand.u32 %s75, 1
        %s422 = smul.addr %s421, 80
        %s423 = scalar_lea.vmem [#allocation4], %s422
        // Predicated region
        $region124: #{delta_forward.1} parent=118 // pred_check
          %p424 = pneg %p88
        $region125: #{delta_forward.1} parent=118 // pred_check_branch
          %426 = sbr.rel (%p424) target = $region127
        $region126: #{delta_forward.1} parent=118 // pred_region
          _
        $region127: #{delta_forward.1} parent=118 // pred_fallthru
          _
        %s427 = sand.u32 %s111, 1
        %s428 = sand.u32 %s111, 1
        %s429 = smul.addr %s428, 80
        %s430 = scalar_lea.vmem [#allocation5], %s429
        // Predicated region
        $region128: #{delta_forward.1} parent=118 // pred_check
          %p431 = pneg %p124
        $region129: #{delta_forward.1} parent=118 // pred_check_branch
          %433 = sbr.rel (%p431) target = $region131
        $region130: #{delta_forward.1} parent=118 // pred_region
          _
        $region131: #{delta_forward.1} parent=118 // pred_fallthru
          _
        %s434 = sand.u32 %s39, 1
        %s435 = sand.u32 %s39, 1
        %s436 = smul.addr %s435, 160
        %s437 = scalar_lea.vmem [#allocation3], %s436
        %p438 = pneg %p52
        %p439 = pneg %p49
        %s440 = sand.u32 %s75, 1
        %s441 = sand.u32 %s75, 1
        %s442 = smul.addr %s441, 80
        %s443 = scalar_lea.vmem [#allocation4], %s442
        %p444 = pneg %p88
        %p445 = pneg %p85
        %s446 = sand.u32 %s111, 1
        %s447 = sand.u32 %s111, 1
        %s448 = smul.addr %s447, 80
        %s449 = scalar_lea.vmem [#allocation5], %s448
        %p450 = pneg %p124
        %p451 = pneg %p121
        %p452 = pneg %p152
        %p453 = pneg %p149
        %s454 = sand.u32 %s139, 1
        %s455 = scalar_lea.sflag [#allocation7], %s454
        %s456 = sand.u32 %s139, 1
        %s457 = smul.addr %s456, 480
        %s458 = scalar_lea.vmem [#allocation6], %s457
        %s459 = smul.u32 2, %s22
        %s460 = smul.u32 %s22, 2
        %s461 = ssub.s32 %s460, 1
        %p462 = scmp.gt.s32.totalorder %s461, 0
        %s463 = scalar_select %p462, %s461, 0
        %s464 = sadd.s32 %s22, 1
        %s465 = smul.u32 %s464, 2
        %p466 = scmp.lt.s32.totalorder %s465, 15
        %s467 = scalar_select %p466, %s465, 15
        %s468 = smul.u32 2, %s22
        %v469 = vld [vmem:[%s416] sm:$0xff]
        %v470 = vld [vmem:[%s416 + $0x8] sm:$0xff]
        %v471 = vld [vmem:[%s416 + $0x10] sm:$0xff]
        %v472 = vld [vmem:[%s416 + $0x18] sm:$0xff]
        %v473 = vld [vmem:[%s416 + $0x20] sm:$0xff]
        %v474 = vld [vmem:[%s416 + $0x28] sm:$0xff]
        %v475 = vld [vmem:[%s416 + $0x30] sm:$0xff]
        %v476 = vld [vmem:[%s416 + $0x38] sm:$0xff]
        %v477 = vld [vmem:[%s416 + $0x40] sm:$0xff]
        %v478 = vld [vmem:[%s416 + $0x48] sm:$0xff]
        %v479 = vld [vmem:[%s416 + $0x50] sm:$0xff]
        %v480 = vld [vmem:[%s416 + $0x58] sm:$0xff]
        %v481 = vld [vmem:[%s416 + $0x60] sm:$0xff]
        %v482 = vld [vmem:[%s416 + $0x68] sm:$0xff]
        %v483 = vld [vmem:[%s416 + $0x70] sm:$0xff]
        %v484 = vld [vmem:[%s416 + $0x78] sm:$0xff]
        %v485 = vld [vmem:[%s416 + $0x80] sm:$0xff]
        %v486 = vld [vmem:[%s416 + $0x88] sm:$0xff]
        %v487 = vld [vmem:[%s416 + $0x90] sm:$0xff]
        %v488 = vld [vmem:[%s416 + $0x98] sm:$0xff]
        %489 = vst [vmem:[#allocation2 + $0x8] sm:$0xff] %v469
        %490 = vst [vmem:[#allocation2 + $0x10] sm:$0xff] %v470
        %491 = vst [vmem:[#allocation2 + $0x28] sm:$0xff] %v471
        %492 = vst [vmem:[#allocation2 + $0x30] sm:$0xff] %v472
        %493 = vst [vmem:[#allocation2 + $0x48] sm:$0xff] %v473
        %494 = vst [vmem:[#allocation2 + $0x50] sm:$0xff] %v474
        %495 = vst [vmem:[#allocation2 + $0x68] sm:$0xff] %v475
        %496 = vst [vmem:[#allocation2 + $0x70] sm:$0xff] %v476
        %497 = vst [vmem:[#allocation2 + $0x88] sm:$0xff] %v477
        %498 = vst [vmem:[#allocation2 + $0x90] sm:$0xff] %v478
        %499 = vst [vmem:[#allocation2 + $0xa8] sm:$0xff] %v479
        %500 = vst [vmem:[#allocation2 + $0xb0] sm:$0xff] %v480
        %501 = vst [vmem:[#allocation2 + $0xc8] sm:$0xff] %v481
        %502 = vst [vmem:[#allocation2 + $0xd0] sm:$0xff] %v482
        %503 = vst [vmem:[#allocation2 + $0xe8] sm:$0xff] %v483
        %504 = vst [vmem:[#allocation2 + $0xf0] sm:$0xff] %v484
        %505 = vst [vmem:[#allocation2 + $0x108] sm:$0xff] %v485
        %506 = vst [vmem:[#allocation2 + $0x110] sm:$0xff] %v486
        %507 = vst [vmem:[#allocation2 + $0x128] sm:$0xff] %v487
        %508 = vst [vmem:[#allocation2 + $0x130] sm:$0xff] %v488
        %p509 = scmp.eq.s32.totalorder %s22, 0
        // Predicated region
        $region132: #{delta_forward.1} parent=118 // pred_check
          %p510 = pneg %p509
        $region133: #{delta_forward.1} parent=118 // pred_check_branch
          %512 = sbr.rel (%p510) target = $region135
        $region134: #{delta_forward.1} parent=118 // pred_region
          %513 = vst [vmem:[#allocation2] sm:$0xff] 0.0
          %514 = vst [vmem:[#allocation2 + $0x20] sm:$0xff] 0.0
          %515 = vst [vmem:[#allocation2 + $0x40] sm:$0xff] 0.0
          %516 = vst [vmem:[#allocation2 + $0x60] sm:$0xff] 0.0
          %517 = vst [vmem:[#allocation2 + $0x80] sm:$0xff] 0.0
          %518 = vst [vmem:[#allocation2 + $0xa0] sm:$0xff] 0.0
          %519 = vst [vmem:[#allocation2 + $0xc0] sm:$0xff] 0.0
          %520 = vst [vmem:[#allocation2 + $0xe0] sm:$0xff] 0.0
          %521 = vst [vmem:[#allocation2 + $0x100] sm:$0xff] 0.0
          %522 = vst [vmem:[#allocation2 + $0x120] sm:$0xff] 0.0
        $region135: #{delta_forward.1} parent=118 // pred_fallthru
          _
        %p523 = scmp.gt.s32.totalorder %s22, 0
        // Predicated region
        $region136: #{delta_forward.1} parent=118 // pred_check
          %p524 = pneg %p523
        $region137: #{delta_forward.1} parent=118 // pred_check_branch
          %526 = sbr.rel (%p524) target = $region139
        $region138: #{delta_forward.1} parent=118 // pred_region
          %v527 = vld [vmem:[%s423] sm:$0xff]
          %v528 = vld [vmem:[%s423 + $0x8] sm:$0xff]
          %v529 = vld [vmem:[%s423 + $0x10] sm:$0xff]
          %v530 = vld [vmem:[%s423 + $0x18] sm:$0xff]
          %v531 = vld [vmem:[%s423 + $0x20] sm:$0xff]
          %v532 = vld [vmem:[%s423 + $0x28] sm:$0xff]
          %v533 = vld [vmem:[%s423 + $0x30] sm:$0xff]
          %v534 = vld [vmem:[%s423 + $0x38] sm:$0xff]
          %v535 = vld [vmem:[%s423 + $0x40] sm:$0xff]
          %v536 = vld [vmem:[%s423 + $0x48] sm:$0xff]
          %537 = vst [vmem:[#allocation2] sm:$0xff] %v527
          %538 = vst [vmem:[#allocation2 + $0x20] sm:$0xff] %v528
          %539 = vst [vmem:[#allocation2 + $0x40] sm:$0xff] %v529
          %540 = vst [vmem:[#allocation2 + $0x60] sm:$0xff] %v530
          %541 = vst [vmem:[#allocation2 + $0x80] sm:$0xff] %v531
          %542 = vst [vmem:[#allocation2 + $0xa0] sm:$0xff] %v532
          %543 = vst [vmem:[#allocation2 + $0xc0] sm:$0xff] %v533
          %544 = vst [vmem:[#allocation2 + $0xe0] sm:$0xff] %v534
          %545 = vst [vmem:[#allocation2 + $0x100] sm:$0xff] %v535
          %546 = vst [vmem:[#allocation2 + $0x120] sm:$0xff] %v536
        $region139: #{delta_forward.1} parent=118 // pred_fallthru
          _
        %p547 = scmp.eq.s32.totalorder %s22, 7
        // Predicated region
        $region140: #{delta_forward.1} parent=118 // pred_check
          %p548 = pneg %p547
        $region141: #{delta_forward.1} parent=118 // pred_check_branch
          %550 = sbr.rel (%p548) target = $region143
        $region142: #{delta_forward.1} parent=118 // pred_region
          %551 = vst [vmem:[#allocation2 + $0x18] sm:$0xff] 0.0
          %552 = vst [vmem:[#allocation2 + $0x38] sm:$0xff] 0.0
          %553 = vst [vmem:[#allocation2 + $0x58] sm:$0xff] 0.0
          %554 = vst [vmem:[#allocation2 + $0x78] sm:$0xff] 0.0
          %555 = vst [vmem:[#allocation2 + $0x98] sm:$0xff] 0.0
          %556 = vst [vmem:[#allocation2 + $0xb8] sm:$0xff] 0.0
          %557 = vst [vmem:[#allocation2 + $0xd8] sm:$0xff] 0.0
          %558 = vst [vmem:[#allocation2 + $0xf8] sm:$0xff] 0.0
          %559 = vst [vmem:[#allocation2 + $0x118] sm:$0xff] 0.0
          %560 = vst [vmem:[#allocation2 + $0x138] sm:$0xff] 0.0
        $region143: #{delta_forward.1} parent=118 // pred_fallthru
          _
        %p561 = scmp.lt.s32.totalorder %s22, 7
        // Predicated region
        $region144: #{delta_forward.1} parent=118 // pred_check
          %p562 = pneg %p561
        $region145: #{delta_forward.1} parent=118 // pred_check_branch
          %564 = sbr.rel (%p562) target = $region147
        $region146: #{delta_forward.1} parent=118 // pred_region
          %v565 = vld [vmem:[%s430] sm:$0xff]
          %v566 = vld [vmem:[%s430 + $0x8] sm:$0xff]
          %v567 = vld [vmem:[%s430 + $0x10] sm:$0xff]
          %v568 = vld [vmem:[%s430 + $0x18] sm:$0xff]
          %v569 = vld [vmem:[%s430 + $0x20] sm:$0xff]
          %v570 = vld [vmem:[%s430 + $0x28] sm:$0xff]
          %v571 = vld [vmem:[%s430 + $0x30] sm:$0xff]
          %v572 = vld [vmem:[%s430 + $0x38] sm:$0xff]
          %v573 = vld [vmem:[%s430 + $0x40] sm:$0xff]
          %v574 = vld [vmem:[%s430 + $0x48] sm:$0xff]
          %575 = vst [vmem:[#allocation2 + $0x18] sm:$0xff] %v565
          %576 = vst [vmem:[#allocation2 + $0x38] sm:$0xff] %v566
          %577 = vst [vmem:[#allocation2 + $0x58] sm:$0xff] %v567
          %578 = vst [vmem:[#allocation2 + $0x78] sm:$0xff] %v568
          %579 = vst [vmem:[#allocation2 + $0x98] sm:$0xff] %v569
          %580 = vst [vmem:[#allocation2 + $0xb8] sm:$0xff] %v570
          %581 = vst [vmem:[#allocation2 + $0xd8] sm:$0xff] %v571
          %582 = vst [vmem:[#allocation2 + $0xf8] sm:$0xff] %v572
          %583 = vst [vmem:[#allocation2 + $0x118] sm:$0xff] %v573
          %584 = vst [vmem:[#allocation2 + $0x138] sm:$0xff] %v574
        $region147: #{delta_forward.1} parent=118 // pred_fallthru
          _
        %v585 = vld [vmem:[%s416] sm:$0xff]
        %v586 = vld [vmem:[%s416 + $0x8] sm:$0xff]
        %v587 = vld [vmem:[%s416 + $0x10] sm:$0xff]
        %v588 = vld [vmem:[%s416 + $0x18] sm:$0xff]
        %v589 = vld [vmem:[%s416 + $0x20] sm:$0xff]
        %v590 = vld [vmem:[%s416 + $0x28] sm:$0xff]
        %v591 = vld [vmem:[%s416 + $0x30] sm:$0xff]
        %v592 = vld [vmem:[%s416 + $0x38] sm:$0xff]
        %v593 = vld [vmem:[%s416 + $0x40] sm:$0xff]
        %v594 = vld [vmem:[%s416 + $0x48] sm:$0xff]
        %v595 = vld [vmem:[%s416 + $0x50] sm:$0xff]
        %v596 = vld [vmem:[%s416 + $0x58] sm:$0xff]
        %v597 = vld [vmem:[%s416 + $0x60] sm:$0xff]
        %v598 = vld [vmem:[%s416 + $0x68] sm:$0xff]
        %v599 = vld [vmem:[%s416 + $0x70] sm:$0xff]
        %v600 = vld [vmem:[%s416 + $0x78] sm:$0xff]
        %v601 = vld [vmem:[%s416 + $0x80] sm:$0xff]
        %v602 = vld [vmem:[%s416 + $0x88] sm:$0xff]
        %v603 = vld [vmem:[%s416 + $0x90] sm:$0xff]
        %v604 = vld [vmem:[%s416 + $0x98] sm:$0xff]
        %605 = vst [vmem:[%s458] sm:$0xff] %v585
        %606 = vst [vmem:[%s458 + $0x8] sm:$0xff] %v586
        %607 = vst [vmem:[%s458 + $0x10] sm:$0xff] %v587
        %608 = vst [vmem:[%s458 + $0x18] sm:$0xff] %v588
        %609 = vst [vmem:[%s458 + $0x20] sm:$0xff] %v589
        %610 = vst [vmem:[%s458 + $0x28] sm:$0xff] %v590
        %611 = vst [vmem:[%s458 + $0x30] sm:$0xff] %v591
        %612 = vst [vmem:[%s458 + $0x38] sm:$0xff] %v592
        %613 = vst [vmem:[%s458 + $0x40] sm:$0xff] %v593
        %614 = vst [vmem:[%s458 + $0x48] sm:$0xff] %v594
        %615 = vst [vmem:[%s458 + $0x50] sm:$0xff] %v595
        %616 = vst [vmem:[%s458 + $0x58] sm:$0xff] %v596
        %617 = vst [vmem:[%s458 + $0x60] sm:$0xff] %v597
        %618 = vst [vmem:[%s458 + $0x68] sm:$0xff] %v598
        %619 = vst [vmem:[%s458 + $0x70] sm:$0xff] %v599
        %620 = vst [vmem:[%s458 + $0x78] sm:$0xff] %v600
        %621 = vst [vmem:[%s458 + $0x80] sm:$0xff] %v601
        %622 = vst [vmem:[%s458 + $0x88] sm:$0xff] %v602
        %623 = vst [vmem:[%s458 + $0x90] sm:$0xff] %v603
        %624 = vst [vmem:[%s458 + $0x98] sm:$0xff] %v604
        %v625 = vld [vmem:[#allocation2] sm:$0xff]
        %v626 = vld [vmem:[#allocation2 + $0x8] sm:$0xff]
        %v627 = vld [vmem:[#allocation2 + $0x10] sm:$0xff]
        %v628 = vld [vmem:[#allocation2 + $0x20] sm:$0xff]
        %v629 = vld [vmem:[#allocation2 + $0x28] sm:$0xff]
        %v630 = vld [vmem:[#allocation2 + $0x30] sm:$0xff]
        %v631 = vld [vmem:[#allocation2 + $0x40] sm:$0xff]
        %v632 = vld [vmem:[#allocation2 + $0x48] sm:$0xff]
        %v633 = vld [vmem:[#allocation2 + $0x50] sm:$0xff]
        %v634 = vld [vmem:[#allocation2 + $0x60] sm:$0xff]
        %v635 = vld [vmem:[#allocation2 + $0x68] sm:$0xff]
        %v636 = vld [vmem:[#allocation2 + $0x70] sm:$0xff]
        %v637 = vld [vmem:[#allocation2 + $0x80] sm:$0xff]
        %v638 = vld [vmem:[#allocation2 + $0x88] sm:$0xff]
        %v639 = vld [vmem:[#allocation2 + $0x90] sm:$0xff]
        %v640 = vld [vmem:[#allocation2 + $0xa0] sm:$0xff]
        %v641 = vld [vmem:[#allocation2 + $0xa8] sm:$0xff]
        %v642 = vld [vmem:[#allocation2 + $0xb0] sm:$0xff]
        %v643 = vld [vmem:[#allocation2 + $0xc0] sm:$0xff]
        %v644 = vld [vmem:[#allocation2 + $0xc8] sm:$0xff]
        %v645 = vld [vmem:[#allocation2 + $0xd0] sm:$0xff]
        %v646 = vld [vmem:[#allocation2 + $0xe0] sm:$0xff]
        %v647 = vld [vmem:[#allocation2 + $0xe8] sm:$0xff]
        %v648 = vld [vmem:[#allocation2 + $0xf0] sm:$0xff]
        %v649 = vld [vmem:[#allocation2 + $0x100] sm:$0xff]
        %v650 = vld [vmem:[#allocation2 + $0x108] sm:$0xff]
        %v651 = vld [vmem:[#allocation2 + $0x110] sm:$0xff]
        %v652 = vld [vmem:[#allocation2 + $0x120] sm:$0xff]
        %v653 = vld [vmem:[#allocation2 + $0x128] sm:$0xff]
        %v654 = vld [vmem:[#allocation2 + $0x130] sm:$0xff]
        %v655 = vmul.f32 %v625, -0.2
        %v656 = vmul.f32 %v626, -0.2
        %v657 = vmul.f32 %v627, -0.2
        %v658 = vmul.f32 %v628, -0.2
        %v659 = vmul.f32 %v629, -0.2
        %v660 = vmul.f32 %v630, -0.2
        %v661 = vmul.f32 %v631, -0.2
        %v662 = vmul.f32 %v632, -0.2
        %v663 = vmul.f32 %v633, -0.2
        %v664 = vmul.f32 %v634, -0.2
        %v665 = vmul.f32 %v635, -0.2
        %v666 = vmul.f32 %v636, -0.2
        %v667 = vmul.f32 %v637, -0.2
        %v668 = vmul.f32 %v638, -0.2
        %v669 = vmul.f32 %v639, -0.2
        %v670 = vmul.f32 %v640, -0.2
        %v671 = vmul.f32 %v641, -0.2
        %v672 = vmul.f32 %v642, -0.2
        %v673 = vmul.f32 %v643, -0.2
        %v674 = vmul.f32 %v644, -0.2
        %v675 = vmul.f32 %v645, -0.2
        %v676 = vmul.f32 %v646, -0.2
        %v677 = vmul.f32 %v647, -0.2
        %v678 = vmul.f32 %v648, -0.2
        %v679 = vmul.f32 %v649, -0.2
        %v680 = vmul.f32 %v650, -0.2
        %v681 = vmul.f32 %v651, -0.2
        %v682 = vmul.f32 %v652, -0.2
        %v683 = vmul.f32 %v653, -0.2
        %v684 = vmul.f32 %v654, -0.2
        %v685 = vmul.f32 %v625, -0.1
        %v686 = vmul.f32 %v626, -0.1
        %v687 = vmul.f32 %v627, -0.1
        %v688 = vmul.f32 %v628, -0.1
        %v689 = vmul.f32 %v629, -0.1
        %v690 = vmul.f32 %v630, -0.1
        %v691 = vmul.f32 %v631, -0.1
        %v692 = vmul.f32 %v632, -0.1
        %v693 = vmul.f32 %v633, -0.1
        %v694 = vmul.f32 %v634, -0.1
        %v695 = vmul.f32 %v635, -0.1
        %v696 = vmul.f32 %v636, -0.1
        %v697 = vmul.f32 %v637, -0.1
        %v698 = vmul.f32 %v638, -0.1
        %v699 = vmul.f32 %v639, -0.1
        %v700 = vmul.f32 %v640, -0.1
        %v701 = vmul.f32 %v641, -0.1
        %v702 = vmul.f32 %v642, -0.1
        %v703 = vmul.f32 %v643, -0.1
        %v704 = vmul.f32 %v644, -0.1
        %v705 = vmul.f32 %v645, -0.1
        %v706 = vmul.f32 %v646, -0.1
        %v707 = vmul.f32 %v647, -0.1
        %v708 = vmul.f32 %v648, -0.1
        %v709 = vmul.f32 %v649, -0.1
        %v710 = vmul.f32 %v650, -0.1
        %v711 = vmul.f32 %v651, -0.1
        %v712 = vmul.f32 %v652, -0.1
        %v713 = vmul.f32 %v653, -0.1
        %v714 = vmul.f32 %v654, -0.1
        %745 = vrot.lane.b32.xlu0 %v685, 127
        %v746 = vpop.permute.xlu0 %745
        %747 = vrot.lane.b32.xlu0 %v686, 127
        %v748 = vpop.permute.xlu0 %747
        %749 = vrot.lane.b32.xlu0 %v687, 127
        %v750 = vpop.permute.xlu0 %749
        %751 = vrot.lane.b32.xlu0 %v688, 127
        %v752 = vpop.permute.xlu0 %751
        %753 = vrot.lane.b32.xlu0 %v689, 127
        %v754 = vpop.permute.xlu0 %753
        %755 = vrot.lane.b32.xlu0 %v690, 127
        %v756 = vpop.permute.xlu0 %755
        %757 = vrot.lane.b32.xlu0 %v691, 127
        %v758 = vpop.permute.xlu0 %757
        %759 = vrot.lane.b32.xlu0 %v692, 127
        %v760 = vpop.permute.xlu0 %759
        %761 = vrot.lane.b32.xlu0 %v693, 127
        %v762 = vpop.permute.xlu0 %761
        %763 = vrot.lane.b32.xlu0 %v694, 127
        %v764 = vpop.permute.xlu0 %763
        %765 = vrot.lane.b32.xlu0 %v695, 127
        %v766 = vpop.permute.xlu0 %765
        %767 = vrot.lane.b32.xlu0 %v696, 127
        %v768 = vpop.permute.xlu0 %767
        %769 = vrot.lane.b32.xlu0 %v697, 127
        %v770 = vpop.permute.xlu0 %769
        %771 = vrot.lane.b32.xlu0 %v698, 127
        %v772 = vpop.permute.xlu0 %771
        %773 = vrot.lane.b32.xlu0 %v699, 127
        %v774 = vpop.permute.xlu0 %773
        %775 = vrot.lane.b32.xlu0 %v700, 127
        %v776 = vpop.permute.xlu0 %775
        %777 = vrot.lane.b32.xlu0 %v701, 127
        %v778 = vpop.permute.xlu0 %777
        %779 = vrot.lane.b32.xlu0 %v702, 127
        %v780 = vpop.permute.xlu0 %779
        %781 = vrot.lane.b32.xlu0 %v703, 127
        %v782 = vpop.permute.xlu0 %781
        %783 = vrot.lane.b32.xlu0 %v704, 127
        %v784 = vpop.permute.xlu0 %783
        %785 = vrot.lane.b32.xlu0 %v705, 127
        %v786 = vpop.permute.xlu0 %785
        %787 = vrot.lane.b32.xlu0 %v706, 127
        %v788 = vpop.permute.xlu0 %787
        %789 = vrot.lane.b32.xlu0 %v707, 127
        %v790 = vpop.permute.xlu0 %789
        %791 = vrot.lane.b32.xlu0 %v708, 127
        %v792 = vpop.permute.xlu0 %791
        %793 = vrot.lane.b32.xlu0 %v709, 127
        %v794 = vpop.permute.xlu0 %793
        %795 = vrot.lane.b32.xlu0 %v710, 127
        %v796 = vpop.permute.xlu0 %795
        %797 = vrot.lane.b32.xlu0 %v711, 127
        %v798 = vpop.permute.xlu0 %797
        %799 = vrot.lane.b32.xlu0 %v712, 127
        %v800 = vpop.permute.xlu0 %799
        %801 = vrot.lane.b32.xlu0 %v713, 127
        %v802 = vpop.permute.xlu0 %801
        %803 = vrot.lane.b32.xlu0 %v714, 127
        %v804 = vpop.permute.xlu0 %803
        %vm805 = vcmask 1039360
        %v806 = vsel %vm805, %v746, %v748
        %v807 = vsel %vm805, %v748, %v750
        %v808 = vsel %vm805, %v752, %v754
        %v809 = vsel %vm805, %v754, %v756
        %v810 = vsel %vm805, %v758, %v760
        %v811 = vsel %vm805, %v760, %v762
        %v812 = vsel %vm805, %v764, %v766
        %v813 = vsel %vm805, %v766, %v768
        %v814 = vsel %vm805, %v770, %v772
        %v815 = vsel %vm805, %v772, %v774
        %v816 = vsel %vm805, %v776, %v778
        %v817 = vsel %vm805, %v778, %v780
        %v818 = vsel %vm805, %v782, %v784
        %v819 = vsel %vm805, %v784, %v786
        %v820 = vsel %vm805, %v788, %v790
        %v821 = vsel %vm805, %v790, %v792
        %v822 = vsel %vm805, %v794, %v796
        %v823 = vsel %vm805, %v796, %v798
        %v824 = vsel %vm805, %v800, %v802
        %v825 = vsel %vm805, %v802, %v804
        %v856 = vadd.f32 %v655, %v806
        %v857 = vadd.f32 %v656, %v807
        %v858 = vadd.f32 %v657, %v750
        %v859 = vadd.f32 %v658, %v808
        %v860 = vadd.f32 %v659, %v809
        %v861 = vadd.f32 %v660, %v756
        %v862 = vadd.f32 %v661, %v810
        %v863 = vadd.f32 %v662, %v811
        %v864 = vadd.f32 %v663, %v762
        %v865 = vadd.f32 %v664, %v812
        %v866 = vadd.f32 %v665, %v813
        %v867 = vadd.f32 %v666, %v768
        %v868 = vadd.f32 %v667, %v814
        %v869 = vadd.f32 %v668, %v815
        %v870 = vadd.f32 %v669, %v774
        %v871 = vadd.f32 %v670, %v816
        %v872 = vadd.f32 %v671, %v817
        %v873 = vadd.f32 %v672, %v780
        %v874 = vadd.f32 %v673, %v818
        %v875 = vadd.f32 %v674, %v819
        %v876 = vadd.f32 %v675, %v786
        %v877 = vadd.f32 %v676, %v820
        %v878 = vadd.f32 %v677, %v821
        %v879 = vadd.f32 %v678, %v792
        %v880 = vadd.f32 %v679, %v822
        %v881 = vadd.f32 %v680, %v823
        %v882 = vadd.f32 %v681, %v798
        %v883 = vadd.f32 %v682, %v824
        %v884 = vadd.f32 %v683, %v825
        %v885 = vadd.f32 %v684, %v804
        %v886 = vld [vmem:[#allocation2 + $0x8] sm:$0xff]
        %v887 = vld [vmem:[#allocation2 + $0x10] sm:$0xff]
        %v888 = vld [vmem:[#allocation2 + $0x18] sm:$0xff]
        %v889 = vld [vmem:[#allocation2 + $0x28] sm:$0xff]
        %v890 = vld [vmem:[#allocation2 + $0x30] sm:$0xff]
        %v891 = vld [vmem:[#allocation2 + $0x38] sm:$0xff]
        %v892 = vld [vmem:[#allocation2 + $0x48] sm:$0xff]
        %v893 = vld [vmem:[#allocation2 + $0x50] sm:$0xff]
        %v894 = vld [vmem:[#allocation2 + $0x58] sm:$0xff]
        %v895 = vld [vmem:[#allocation2 + $0x68] sm:$0xff]
        %v896 = vld [vmem:[#allocation2 + $0x70] sm:$0xff]
        %v897 = vld [vmem:[#allocation2 + $0x78] sm:$0xff]
        %v898 = vld [vmem:[#allocation2 + $0x88] sm:$0xff]
        %v899 = vld [vmem:[#allocation2 + $0x90] sm:$0xff]
        %v900 = vld [vmem:[#allocation2 + $0x98] sm:$0xff]
        %v901 = vld [vmem:[#allocation2 + $0xa8] sm:$0xff]
        %v902 = vld [vmem:[#allocation2 + $0xb0] sm:$0xff]
        %v903 = vld [vmem:[#allocation2 + $0xb8] sm:$0xff]
        %v904 = vld [vmem:[#allocation2 + $0xc8] sm:$0xff]
        %v905 = vld [vmem:[#allocation2 + $0xd0] sm:$0xff]
        %v906 = vld [vmem:[#allocation2 + $0xd8] sm:$0xff]
        %v907 = vld [vmem:[#allocation2 + $0xe8] sm:$0xff]
        %v908 = vld [vmem:[#allocation2 + $0xf0] sm:$0xff]
        %v909 = vld [vmem:[#allocation2 + $0xf8] sm:$0xff]
        %v910 = vld [vmem:[#allocation2 + $0x108] sm:$0xff]
        %v911 = vld [vmem:[#allocation2 + $0x110] sm:$0xff]
        %v912 = vld [vmem:[#allocation2 + $0x118] sm:$0xff]
        %v913 = vld [vmem:[#allocation2 + $0x128] sm:$0xff]
        %v914 = vld [vmem:[#allocation2 + $0x130] sm:$0xff]
        %v915 = vld [vmem:[#allocation2 + $0x138] sm:$0xff]
        %v916 = vmul.f32 %v886, 0.1
        %v917 = vmul.f32 %v887, 0.1
        %v918 = vmul.f32 %v888, 0.1
        %v919 = vmul.f32 %v889, 0.1
        %v920 = vmul.f32 %v890, 0.1
        %v921 = vmul.f32 %v891, 0.1
        %v922 = vmul.f32 %v892, 0.1
        %v923 = vmul.f32 %v893, 0.1
        %v924 = vmul.f32 %v894, 0.1
        %v925 = vmul.f32 %v895, 0.1
        %v926 = vmul.f32 %v896, 0.1
        %v927 = vmul.f32 %v897, 0.1
        %v928 = vmul.f32 %v898, 0.1
        %v929 = vmul.f32 %v899, 0.1
        %v930 = vmul.f32 %v900, 0.1
        %v931 = vmul.f32 %v901, 0.1
        %v932 = vmul.f32 %v902, 0.1
        %v933 = vmul.f32 %v903, 0.1
        %v934 = vmul.f32 %v904, 0.1
        %v935 = vmul.f32 %v905, 0.1
        %v936 = vmul.f32 %v906, 0.1
        %v937 = vmul.f32 %v907, 0.1
        %v938 = vmul.f32 %v908, 0.1
        %v939 = vmul.f32 %v909, 0.1
        %v940 = vmul.f32 %v910, 0.1
        %v941 = vmul.f32 %v911, 0.1
        %v942 = vmul.f32 %v912, 0.1
        %v943 = vmul.f32 %v913, 0.1
        %v944 = vmul.f32 %v914, 0.1
        %v945 = vmul.f32 %v915, 0.1
        %976 = vrot.lane.b32.xlu0 %v916, 125
        %v977 = vpop.permute.xlu0 %976
        %978 = vrot.lane.b32.xlu0 %v917, 125
        %v979 = vpop.permute.xlu0 %978
        %980 = vrot.lane.b32.xlu0 %v918, 125
        %v981 = vpop.permute.xlu0 %980
        %982 = vrot.lane.b32.xlu0 %v919, 125
        %v983 = vpop.permute.xlu0 %982
        %984 = vrot.lane.b32.xlu0 %v920, 125
        %v985 = vpop.permute.xlu0 %984
        %986 = vrot.lane.b32.xlu0 %v921, 125
        %v987 = vpop.permute.xlu0 %986
        %988 = vrot.lane.b32.xlu0 %v922, 125
        %v989 = vpop.permute.xlu0 %988
        %990 = vrot.lane.b32.xlu0 %v923, 125
        %v991 = vpop.permute.xlu0 %990
        %992 = vrot.lane.b32.xlu0 %v924, 125
        %v993 = vpop.permute.xlu0 %992
        %994 = vrot.lane.b32.xlu0 %v925, 125
        %v995 = vpop.permute.xlu0 %994
        %996 = vrot.lane.b32.xlu0 %v926, 125
        %v997 = vpop.permute.xlu0 %996
        %998 = vrot.lane.b32.xlu0 %v927, 125
        %v999 = vpop.permute.xlu0 %998
        %1000 = vrot.lane.b32.xlu0 %v928, 125
        %v1001 = vpop.permute.xlu0 %1000
        %1002 = vrot.lane.b32.xlu0 %v929, 125
        %v1003 = vpop.permute.xlu0 %1002
        %1004 = vrot.lane.b32.xlu0 %v930, 125
        %v1005 = vpop.permute.xlu0 %1004
        %1006 = vrot.lane.b32.xlu0 %v931, 125
        %v1007 = vpop.permute.xlu0 %1006
        %1008 = vrot.lane.b32.xlu0 %v932, 125
        %v1009 = vpop.permute.xlu0 %1008
        %1010 = vrot.lane.b32.xlu0 %v933, 125
        %v1011 = vpop.permute.xlu0 %1010
        %1012 = vrot.lane.b32.xlu0 %v934, 125
        %v1013 = vpop.permute.xlu0 %1012
        %1014 = vrot.lane.b32.xlu0 %v935, 125
        %v1015 = vpop.permute.xlu0 %1014
        %1016 = vrot.lane.b32.xlu0 %v936, 125
        %v1017 = vpop.permute.xlu0 %1016
        %1018 = vrot.lane.b32.xlu0 %v937, 125
        %v1019 = vpop.permute.xlu0 %1018
        %1020 = vrot.lane.b32.xlu0 %v938, 125
        %v1021 = vpop.permute.xlu0 %1020
        %1022 = vrot.lane.b32.xlu0 %v939, 125
        %v1023 = vpop.permute.xlu0 %1022
        %1024 = vrot.lane.b32.xlu0 %v940, 125
        %v1025 = vpop.permute.xlu0 %1024
        %1026 = vrot.lane.b32.xlu0 %v941, 125
        %v1027 = vpop.permute.xlu0 %1026
        %1028 = vrot.lane.b32.xlu0 %v942, 125
        %v1029 = vpop.permute.xlu0 %1028
        %1030 = vrot.lane.b32.xlu0 %v943, 125
        %v1031 = vpop.permute.xlu0 %1030
        %1032 = vrot.lane.b32.xlu0 %v944, 125
        %v1033 = vpop.permute.xlu0 %1032
        %1034 = vrot.lane.b32.xlu0 %v945, 125
        %v1035 = vpop.permute.xlu0 %1034
        %vm1036 = vcmask 1022976
        %v1037 = vsel %vm1036, %v977, %v979
        %v1038 = vsel %vm1036, %v979, %v981
        %v1039 = vsel %vm1036, %v983, %v985
        %v1040 = vsel %vm1036, %v985, %v987
        %v1041 = vsel %vm1036, %v989, %v991
        %v1042 = vsel %vm1036, %v991, %v993
        %v1043 = vsel %vm1036, %v995, %v997
        %v1044 = vsel %vm1036, %v997, %v999
        %v1045 = vsel %vm1036, %v1001, %v1003
        %v1046 = vsel %vm1036, %v1003, %v1005
        %v1047 = vsel %vm1036, %v1007, %v1009
        %v1048 = vsel %vm1036, %v1009, %v1011
        %v1049 = vsel %vm1036, %v1013, %v1015
        %v1050 = vsel %vm1036, %v1015, %v1017
        %v1051 = vsel %vm1036, %v1019, %v1021
        %v1052 = vsel %vm1036, %v1021, %v1023
        %v1053 = vsel %vm1036, %v1025, %v1027
        %v1054 = vsel %vm1036, %v1027, %v1029
        %v1055 = vsel %vm1036, %v1031, %v1033
        %v1056 = vsel %vm1036, %v1033, %v1035
        %v1087 = vadd.f32 %v856, %v977
        %v1088 = vadd.f32 %v857, %v1037
        %v1089 = vadd.f32 %v858, %v1038
        %v1090 = vadd.f32 %v859, %v983
        %v1091 = vadd.f32 %v860, %v1039
        %v1092 = vadd.f32 %v861, %v1040
        %v1093 = vadd.f32 %v862, %v989
        %v1094 = vadd.f32 %v863, %v1041
        %v1095 = vadd.f32 %v864, %v1042
        %v1096 = vadd.f32 %v865, %v995
        %v1097 = vadd.f32 %v866, %v1043
        %v1098 = vadd.f32 %v867, %v1044
        %v1099 = vadd.f32 %v868, %v1001
        %v1100 = vadd.f32 %v869, %v1045
        %v1101 = vadd.f32 %v870, %v1046
        %v1102 = vadd.f32 %v871, %v1007
        %v1103 = vadd.f32 %v872, %v1047
        %v1104 = vadd.f32 %v873, %v1048
        %v1105 = vadd.f32 %v874, %v1013
        %v1106 = vadd.f32 %v875, %v1049
        %v1107 = vadd.f32 %v876, %v1050
        %v1108 = vadd.f32 %v877, %v1019
        %v1109 = vadd.f32 %v878, %v1051
        %v1110 = vadd.f32 %v879, %v1052
        %v1111 = vadd.f32 %v880, %v1025
        %v1112 = vadd.f32 %v881, %v1053
        %v1113 = vadd.f32 %v882, %v1054
        %v1114 = vadd.f32 %v883, %v1031
        %v1115 = vadd.f32 %v884, %v1055
        %v1116 = vadd.f32 %v885, %v1056
        %v1117 = vmul.f32 %v886, 0.2
        %v1118 = vmul.f32 %v887, 0.2
        %v1119 = vmul.f32 %v888, 0.2
        %v1120 = vmul.f32 %v889, 0.2
        %v1121 = vmul.f32 %v890, 0.2
        %v1122 = vmul.f32 %v891, 0.2
        %v1123 = vmul.f32 %v892, 0.2
        %v1124 = vmul.f32 %v893, 0.2
        %v1125 = vmul.f32 %v894, 0.2
        %v1126 = vmul.f32 %v895, 0.2
        %v1127 = vmul.f32 %v896, 0.2
        %v1128 = vmul.f32 %v897, 0.2
        %v1129 = vmul.f32 %v898, 0.2
        %v1130 = vmul.f32 %v899, 0.2
        %v1131 = vmul.f32 %v900, 0.2
        %v1132 = vmul.f32 %v901, 0.2
        %v1133 = vmul.f32 %v902, 0.2
        %v1134 = vmul.f32 %v903, 0.2
        %v1135 = vmul.f32 %v904, 0.2
        %v1136 = vmul.f32 %v905, 0.2
        %v1137 = vmul.f32 %v906, 0.2
        %v1138 = vmul.f32 %v907, 0.2
        %v1139 = vmul.f32 %v908, 0.2
        %v1140 = vmul.f32 %v909, 0.2
        %v1141 = vmul.f32 %v910, 0.2
        %v1142 = vmul.f32 %v911, 0.2
        %v1143 = vmul.f32 %v912, 0.2
        %v1144 = vmul.f32 %v913, 0.2
        %v1145 = vmul.f32 %v914, 0.2
        %v1146 = vmul.f32 %v915, 0.2
        %1177 = vrot.lane.b32.xlu0 %v1117, 124
        %v1178 = vpop.permute.xlu0 %1177
        %1179 = vrot.lane.b32.xlu0 %v1118, 124
        %v1180 = vpop.permute.xlu0 %1179
        %1181 = vrot.lane.b32.xlu0 %v1119, 124
        %v1182 = vpop.permute.xlu0 %1181
        %1183 = vrot.lane.b32.xlu0 %v1120, 124
        %v1184 = vpop.permute.xlu0 %1183
        %1185 = vrot.lane.b32.xlu0 %v1121, 124
        %v1186 = vpop.permute.xlu0 %1185
        %1187 = vrot.lane.b32.xlu0 %v1122, 124
        %v1188 = vpop.permute.xlu0 %1187
        %1189 = vrot.lane.b32.xlu0 %v1123, 124
        %v1190 = vpop.permute.xlu0 %1189
        %1191 = vrot.lane.b32.xlu0 %v1124, 124
        %v1192 = vpop.permute.xlu0 %1191
        %1193 = vrot.lane.b32.xlu0 %v1125, 124
        %v1194 = vpop.permute.xlu0 %1193
        %1195 = vrot.lane.b32.xlu0 %v1126, 124
        %v1196 = vpop.permute.xlu0 %1195
        %1197 = vrot.lane.b32.xlu0 %v1127, 124
        %v1198 = vpop.permute.xlu0 %1197
        %1199 = vrot.lane.b32.xlu0 %v1128, 124
        %v1200 = vpop.permute.xlu0 %1199
        %1201 = vrot.lane.b32.xlu0 %v1129, 124
        %v1202 = vpop.permute.xlu0 %1201
        %1203 = vrot.lane.b32.xlu0 %v1130, 124
        %v1204 = vpop.permute.xlu0 %1203
        %1205 = vrot.lane.b32.xlu0 %v1131, 124
        %v1206 = vpop.permute.xlu0 %1205
        %1207 = vrot.lane.b32.xlu0 %v1132, 124
        %v1208 = vpop.permute.xlu0 %1207
        %1209 = vrot.lane.b32.xlu0 %v1133, 124
        %v1210 = vpop.permute.xlu0 %1209
        %1211 = vrot.lane.b32.xlu0 %v1134, 124
        %v1212 = vpop.permute.xlu0 %1211
        %1213 = vrot.lane.b32.xlu0 %v1135, 124
        %v1214 = vpop.permute.xlu0 %1213
        %1215 = vrot.lane.b32.xlu0 %v1136, 124
        %v1216 = vpop.permute.xlu0 %1215
        %1217 = vrot.lane.b32.xlu0 %v1137, 124
        %v1218 = vpop.permute.xlu0 %1217
        %1219 = vrot.lane.b32.xlu0 %v1138, 124
        %v1220 = vpop.permute.xlu0 %1219
        %1221 = vrot.lane.b32.xlu0 %v1139, 124
        %v1222 = vpop.permute.xlu0 %1221
        %1223 = vrot.lane.b32.xlu0 %v1140, 124
        %v1224 = vpop.permute.xlu0 %1223
        %1225 = vrot.lane.b32.xlu0 %v1141, 124
        %v1226 = vpop.permute.xlu0 %1225
        %1227 = vrot.lane.b32.xlu0 %v1142, 124
        %v1228 = vpop.permute.xlu0 %1227
        %1229 = vrot.lane.b32.xlu0 %v1143, 124
        %v1230 = vpop.permute.xlu0 %1229
        %1231 = vrot.lane.b32.xlu0 %v1144, 124
        %v1232 = vpop.permute.xlu0 %1231
        %1233 = vrot.lane.b32.xlu0 %v1145, 124
        %v1234 = vpop.permute.xlu0 %1233
        %1235 = vrot.lane.b32.xlu0 %v1146, 124
        %v1236 = vpop.permute.xlu0 %1235
        %vm1237 = vcmask 1014784
        %v1238 = vsel %vm1237, %v1178, %v1180
        %v1239 = vsel %vm1237, %v1180, %v1182
        %v1240 = vsel %vm1237, %v1184, %v1186
        %v1241 = vsel %vm1237, %v1186, %v1188
        %v1242 = vsel %vm1237, %v1190, %v1192
        %v1243 = vsel %vm1237, %v1192, %v1194
        %v1244 = vsel %vm1237, %v1196, %v1198
        %v1245 = vsel %vm1237, %v1198, %v1200
        %v1246 = vsel %vm1237, %v1202, %v1204
        %v1247 = vsel %vm1237, %v1204, %v1206
        %v1248 = vsel %vm1237, %v1208, %v1210
        %v1249 = vsel %vm1237, %v1210, %v1212
        %v1250 = vsel %vm1237, %v1214, %v1216
        %v1251 = vsel %vm1237, %v1216, %v1218
        %v1252 = vsel %vm1237, %v1220, %v1222
        %v1253 = vsel %vm1237, %v1222, %v1224
        %v1254 = vsel %vm1237, %v1226, %v1228
        %v1255 = vsel %vm1237, %v1228, %v1230
        %v1256 = vsel %vm1237, %v1232, %v1234
        %v1257 = vsel %vm1237, %v1234, %v1236
        %v1288 = vadd.f32 %v1087, %v1178
        %v1289 = vadd.f32 %v1088, %v1238
        %v1290 = vadd.f32 %v1089, %v1239
        %v1291 = vadd.f32 %v1090, %v1184
        %v1292 = vadd.f32 %v1091, %v1240
        %v1293 = vadd.f32 %v1092, %v1241
        %v1294 = vadd.f32 %v1093, %v1190
        %v1295 = vadd.f32 %v1094, %v1242
        %v1296 = vadd.f32 %v1095, %v1243
        %v1297 = vadd.f32 %v1096, %v1196
        %v1298 = vadd.f32 %v1097, %v1244
        %v1299 = vadd.f32 %v1098, %v1245
        %v1300 = vadd.f32 %v1099, %v1202
        %v1301 = vadd.f32 %v1100, %v1246
        %v1302 = vadd.f32 %v1101, %v1247
        %v1303 = vadd.f32 %v1102, %v1208
        %v1304 = vadd.f32 %v1103, %v1248
        %v1305 = vadd.f32 %v1104, %v1249
        %v1306 = vadd.f32 %v1105, %v1214
        %v1307 = vadd.f32 %v1106, %v1250
        %v1308 = vadd.f32 %v1107, %v1251
        %v1309 = vadd.f32 %v1108, %v1220
        %v1310 = vadd.f32 %v1109, %v1252
        %v1311 = vadd.f32 %v1110, %v1253
        %v1312 = vadd.f32 %v1111, %v1226
        %v1313 = vadd.f32 %v1112, %v1254
        %v1314 = vadd.f32 %v1113, %v1255
        %v1315 = vadd.f32 %v1114, %v1232
        %v1316 = vadd.f32 %v1115, %v1256
        %v1317 = vadd.f32 %v1116, %v1257
        %1348 = vrot.lane.b32.xlu0 %v1288, 2
        %v1349 = vpop.permute.xlu0 %1348
        %1350 = vrot.lane.b32.xlu0 %v1289, 2
        %v1351 = vpop.permute.xlu0 %1350
        %1352 = vrot.lane.b32.xlu0 %v1290, 2
        %v1353 = vpop.permute.xlu0 %1352
        %1354 = vrot.lane.b32.xlu0 %v1291, 2
        %v1355 = vpop.permute.xlu0 %1354
        %1356 = vrot.lane.b32.xlu0 %v1292, 2
        %v1357 = vpop.permute.xlu0 %1356
        %1358 = vrot.lane.b32.xlu0 %v1293, 2
        %v1359 = vpop.permute.xlu0 %1358
        %1360 = vrot.lane.b32.xlu0 %v1294, 2
        %v1361 = vpop.permute.xlu0 %1360
        %1362 = vrot.lane.b32.xlu0 %v1295, 2
        %v1363 = vpop.permute.xlu0 %1362
        %1364 = vrot.lane.b32.xlu0 %v1296, 2
        %v1365 = vpop.permute.xlu0 %1364
        %1366 = vrot.lane.b32.xlu0 %v1297, 2
        %v1367 = vpop.permute.xlu0 %1366
        %1368 = vrot.lane.b32.xlu0 %v1298, 2
        %v1369 = vpop.permute.xlu0 %1368
        %1370 = vrot.lane.b32.xlu0 %v1299, 2
        %v1371 = vpop.permute.xlu0 %1370
        %1372 = vrot.lane.b32.xlu0 %v1300, 2
        %v1373 = vpop.permute.xlu0 %1372
        %1374 = vrot.lane.b32.xlu0 %v1301, 2
        %v1375 = vpop.permute.xlu0 %1374
        %1376 = vrot.lane.b32.xlu0 %v1302, 2
        %v1377 = vpop.permute.xlu0 %1376
        %1378 = vrot.lane.b32.xlu0 %v1303, 2
        %v1379 = vpop.permute.xlu0 %1378
        %1380 = vrot.lane.b32.xlu0 %v1304, 2
        %v1381 = vpop.permute.xlu0 %1380
        %1382 = vrot.lane.b32.xlu0 %v1305, 2
        %v1383 = vpop.permute.xlu0 %1382
        %1384 = vrot.lane.b32.xlu0 %v1306, 2
        %v1385 = vpop.permute.xlu0 %1384
        %1386 = vrot.lane.b32.xlu0 %v1307, 2
        %v1387 = vpop.permute.xlu0 %1386
        %1388 = vrot.lane.b32.xlu0 %v1308, 2
        %v1389 = vpop.permute.xlu0 %1388
        %1390 = vrot.lane.b32.xlu0 %v1309, 2
        %v1391 = vpop.permute.xlu0 %1390
        %1392 = vrot.lane.b32.xlu0 %v1310, 2
        %v1393 = vpop.permute.xlu0 %1392
        %1394 = vrot.lane.b32.xlu0 %v1311, 2
        %v1395 = vpop.permute.xlu0 %1394
        %1396 = vrot.lane.b32.xlu0 %v1312, 2
        %v1397 = vpop.permute.xlu0 %1396
        %1398 = vrot.lane.b32.xlu0 %v1313, 2
        %v1399 = vpop.permute.xlu0 %1398
        %1400 = vrot.lane.b32.xlu0 %v1314, 2
        %v1401 = vpop.permute.xlu0 %1400
        %1402 = vrot.lane.b32.xlu0 %v1315, 2
        %v1403 = vpop.permute.xlu0 %1402
        %1404 = vrot.lane.b32.xlu0 %v1316, 2
        %v1405 = vpop.permute.xlu0 %1404
        %1406 = vrot.lane.b32.xlu0 %v1317, 2
        %v1407 = vpop.permute.xlu0 %1406
        %vm1408 = vcmask 15360
        %v1409 = vsel %vm1408, %v1349, %v1351
        %v1410 = vsel %vm1408, %v1351, %v1353
        %v1411 = vsel %vm1408, %v1355, %v1357
        %v1412 = vsel %vm1408, %v1357, %v1359
        %v1413 = vsel %vm1408, %v1361, %v1363
        %v1414 = vsel %vm1408, %v1363, %v1365
        %v1415 = vsel %vm1408, %v1367, %v1369
        %v1416 = vsel %vm1408, %v1369, %v1371
        %v1417 = vsel %vm1408, %v1373, %v1375
        %v1418 = vsel %vm1408, %v1375, %v1377
        %v1419 = vsel %vm1408, %v1379, %v1381
        %v1420 = vsel %vm1408, %v1381, %v1383
        %v1421 = vsel %vm1408, %v1385, %v1387
        %v1422 = vsel %vm1408, %v1387, %v1389
        %v1423 = vsel %vm1408, %v1391, %v1393
        %v1424 = vsel %vm1408, %v1393, %v1395
        %v1425 = vsel %vm1408, %v1397, %v1399
        %v1426 = vsel %vm1408, %v1399, %v1401
        %v1427 = vsel %vm1408, %v1403, %v1405
        %v1428 = vsel %vm1408, %v1405, %v1407
        %s1449 = scalar_lea.vmem %s458, 160 [#allocation6]
        %1450 = vst [vmem:[%s1449] sm:$0xff] %v1409
        %1451 = vst [vmem:[%s1449 + $0x8] sm:$0xff] %v1410
        %1452 = vst [vmem:[%s1449 + $0x10] sm:$0xff] %v1411
        %1453 = vst [vmem:[%s1449 + $0x18] sm:$0xff] %v1412
        %1454 = vst [vmem:[%s1449 + $0x20] sm:$0xff] %v1413
        %1455 = vst [vmem:[%s1449 + $0x28] sm:$0xff] %v1414
        %1456 = vst [vmem:[%s1449 + $0x30] sm:$0xff] %v1415
        %1457 = vst [vmem:[%s1449 + $0x38] sm:$0xff] %v1416
        %1458 = vst [vmem:[%s1449 + $0x40] sm:$0xff] %v1417
        %1459 = vst [vmem:[%s1449 + $0x48] sm:$0xff] %v1418
        %1460 = vst [vmem:[%s1449 + $0x50] sm:$0xff] %v1419
        %1461 = vst [vmem:[%s1449 + $0x58] sm:$0xff] %v1420
        %1462 = vst [vmem:[%s1449 + $0x60] sm:$0xff] %v1421
        %1463 = vst [vmem:[%s1449 + $0x68] sm:$0xff] %v1422
        %1464 = vst [vmem:[%s1449 + $0x70] sm:$0xff] %v1423
        %1465 = vst [vmem:[%s1449 + $0x78] sm:$0xff] %v1424
        %1466 = vst [vmem:[%s1449 + $0x80] sm:$0xff] %v1425
        %1467 = vst [vmem:[%s1449 + $0x88] sm:$0xff] %v1426
        %1468 = vst [vmem:[%s1449 + $0x90] sm:$0xff] %v1427
        %1469 = vst [vmem:[%s1449 + $0x98] sm:$0xff] %v1428
        %v1470 = vld [vmem:[#allocation2] sm:$0xff]
        %v1471 = vld [vmem:[#allocation2 + $0x8] sm:$0xff]
        %v1472 = vld [vmem:[#allocation2 + $0x10] sm:$0xff]
        %v1473 = vld [vmem:[#allocation2 + $0x20] sm:$0xff]
        %v1474 = vld [vmem:[#allocation2 + $0x28] sm:$0xff]
        %v1475 = vld [vmem:[#allocation2 + $0x30] sm:$0xff]
        %v1476 = vld [vmem:[#allocation2 + $0x40] sm:$0xff]
        %v1477 = vld [vmem:[#allocation2 + $0x48] sm:$0xff]
        %v1478 = vld [vmem:[#allocation2 + $0x50] sm:$0xff]
        %v1479 = vld [vmem:[#allocation2 + $0x60] sm:$0xff]
        %v1480 = vld [vmem:[#allocation2 + $0x68] sm:$0xff]
        %v1481 = vld [vmem:[#allocation2 + $0x70] sm:$0xff]
        %v1482 = vld [vmem:[#allocation2 + $0x80] sm:$0xff]
        %v1483 = vld [vmem:[#allocation2 + $0x88] sm:$0xff]
        %v1484 = vld [vmem:[#allocation2 + $0x90] sm:$0xff]
        %v1485 = vld [vmem:[#allocation2 + $0xa0] sm:$0xff]
        %v1486 = vld [vmem:[#allocation2 + $0xa8] sm:$0xff]
        %v1487 = vld [vmem:[#allocation2 + $0xb0] sm:$0xff]
        %v1488 = vld [vmem:[#allocation2 + $0xc0] sm:$0xff]
        %v1489 = vld [vmem:[#allocation2 + $0xc8] sm:$0xff]
        %v1490 = vld [vmem:[#allocation2 + $0xd0] sm:$0xff]
        %v1491 = vld [vmem:[#allocation2 + $0xe0] sm:$0xff]
        %v1492 = vld [vmem:[#allocation2 + $0xe8] sm:$0xff]
        %v1493 = vld [vmem:[#allocation2 + $0xf0] sm:$0xff]
        %v1494 = vld [vmem:[#allocation2 + $0x100] sm:$0xff]
        %v1495 = vld [vmem:[#allocation2 + $0x108] sm:$0xff]
        %v1496 = vld [vmem:[#allocation2 + $0x110] sm:$0xff]
        %v1497 = vld [vmem:[#allocation2 + $0x120] sm:$0xff]
        %v1498 = vld [vmem:[#allocation2 + $0x128] sm:$0xff]
        %v1499 = vld [vmem:[#allocation2 + $0x130] sm:$0xff]
        %v1500 = vmul.f32 %v1470, 0.04
        %v1501 = vmul.f32 %v1471, 0.04
        %v1502 = vmul.f32 %v1472, 0.04
        %v1503 = vmul.f32 %v1473, 0.04
        %v1504 = vmul.f32 %v1474, 0.04
        %v1505 = vmul.f32 %v1475, 0.04
        %v1506 = vmul.f32 %v1476, 0.04
        %v1507 = vmul.f32 %v1477, 0.04
        %v1508 = vmul.f32 %v1478, 0.04
        %v1509 = vmul.f32 %v1479, 0.04
        %v1510 = vmul.f32 %v1480, 0.04
        %v1511 = vmul.f32 %v1481, 0.04
        %v1512 = vmul.f32 %v1482, 0.04
        %v1513 = vmul.f32 %v1483, 0.04
        %v1514 = vmul.f32 %v1484, 0.04
        %v1515 = vmul.f32 %v1485, 0.04
        %v1516 = vmul.f32 %v1486, 0.04
        %v1517 = vmul.f32 %v1487, 0.04
        %v1518 = vmul.f32 %v1488, 0.04
        %v1519 = vmul.f32 %v1489, 0.04
        %v1520 = vmul.f32 %v1490, 0.04
        %v1521 = vmul.f32 %v1491, 0.04
        %v1522 = vmul.f32 %v1492, 0.04
        %v1523 = vmul.f32 %v1493, 0.04
        %v1524 = vmul.f32 %v1494, 0.04
        %v1525 = vmul.f32 %v1495, 0.04
        %v1526 = vmul.f32 %v1496, 0.04
        %v1527 = vmul.f32 %v1497, 0.04
        %v1528 = vmul.f32 %v1498, 0.04
        %v1529 = vmul.f32 %v1499, 0.04
        %1560 = vrot.lane.b32.xlu0 %v1500, 127
        %v1561 = vpop.permute.xlu0 %1560
        %1562 = vrot.lane.b32.xlu0 %v1501, 127
        %v1563 = vpop.permute.xlu0 %1562
        %1564 = vrot.lane.b32.xlu0 %v1502, 127
        %v1565 = vpop.permute.xlu0 %1564
        %1566 = vrot.lane.b32.xlu0 %v1503, 127
        %v1567 = vpop.permute.xlu0 %1566
        %1568 = vrot.lane.b32.xlu0 %v1504, 127
        %v1569 = vpop.permute.xlu0 %1568
        %1570 = vrot.lane.b32.xlu0 %v1505, 127
        %v1571 = vpop.permute.xlu0 %1570
        %1572 = vrot.lane.b32.xlu0 %v1506, 127
        %v1573 = vpop.permute.xlu0 %1572
        %1574 = vrot.lane.b32.xlu0 %v1507, 127
        %v1575 = vpop.permute.xlu0 %1574
        %1576 = vrot.lane.b32.xlu0 %v1508, 127
        %v1577 = vpop.permute.xlu0 %1576
        %1578 = vrot.lane.b32.xlu0 %v1509, 127
        %v1579 = vpop.permute.xlu0 %1578
        %1580 = vrot.lane.b32.xlu0 %v1510, 127
        %v1581 = vpop.permute.xlu0 %1580
        %1582 = vrot.lane.b32.xlu0 %v1511, 127
        %v1583 = vpop.permute.xlu0 %1582
        %1584 = vrot.lane.b32.xlu0 %v1512, 127
        %v1585 = vpop.permute.xlu0 %1584
        %1586 = vrot.lane.b32.xlu0 %v1513, 127
        %v1587 = vpop.permute.xlu0 %1586
        %1588 = vrot.lane.b32.xlu0 %v1514, 127
        %v1589 = vpop.permute.xlu0 %1588
        %1590 = vrot.lane.b32.xlu0 %v1515, 127
        %v1591 = vpop.permute.xlu0 %1590
        %1592 = vrot.lane.b32.xlu0 %v1516, 127
        %v1593 = vpop.permute.xlu0 %1592
        %1594 = vrot.lane.b32.xlu0 %v1517, 127
        %v1595 = vpop.permute.xlu0 %1594
        %1596 = vrot.lane.b32.xlu0 %v1518, 127
        %v1597 = vpop.permute.xlu0 %1596
        %1598 = vrot.lane.b32.xlu0 %v1519, 127
        %v1599 = vpop.permute.xlu0 %1598
        %1600 = vrot.lane.b32.xlu0 %v1520, 127
        %v1601 = vpop.permute.xlu0 %1600
        %1602 = vrot.lane.b32.xlu0 %v1521, 127
        %v1603 = vpop.permute.xlu0 %1602
        %1604 = vrot.lane.b32.xlu0 %v1522, 127
        %v1605 = vpop.permute.xlu0 %1604
        %1606 = vrot.lane.b32.xlu0 %v1523, 127
        %v1607 = vpop.permute.xlu0 %1606
        %1608 = vrot.lane.b32.xlu0 %v1524, 127
        %v1609 = vpop.permute.xlu0 %1608
        %1610 = vrot.lane.b32.xlu0 %v1525, 127
        %v1611 = vpop.permute.xlu0 %1610
        %1612 = vrot.lane.b32.xlu0 %v1526, 127
        %v1613 = vpop.permute.xlu0 %1612
        %1614 = vrot.lane.b32.xlu0 %v1527, 127
        %v1615 = vpop.permute.xlu0 %1614
        %1616 = vrot.lane.b32.xlu0 %v1528, 127
        %v1617 = vpop.permute.xlu0 %1616
        %1618 = vrot.lane.b32.xlu0 %v1529, 127
        %v1619 = vpop.permute.xlu0 %1618
        %v1620 = vsel %vm805, %v1561, %v1563
        %v1621 = vsel %vm805, %v1563, %v1565
        %v1622 = vsel %vm805, %v1567, %v1569
        %v1623 = vsel %vm805, %v1569, %v1571
        %v1624 = vsel %vm805, %v1573, %v1575
        %v1625 = vsel %vm805, %v1575, %v1577
        %v1626 = vsel %vm805, %v1579, %v1581
        %v1627 = vsel %vm805, %v1581, %v1583
        %v1628 = vsel %vm805, %v1585, %v1587
        %v1629 = vsel %vm805, %v1587, %v1589
        %v1630 = vsel %vm805, %v1591, %v1593
        %v1631 = vsel %vm805, %v1593, %v1595
        %v1632 = vsel %vm805, %v1597, %v1599
        %v1633 = vsel %vm805, %v1599, %v1601
        %v1634 = vsel %vm805, %v1603, %v1605
        %v1635 = vsel %vm805, %v1605, %v1607
        %v1636 = vsel %vm805, %v1609, %v1611
        %v1637 = vsel %vm805, %v1611, %v1613
        %v1638 = vsel %vm805, %v1615, %v1617
        %v1639 = vsel %vm805, %v1617, %v1619
        %v1670 = vadd.f32 %v1500, %v1620
        %v1671 = vadd.f32 %v1501, %v1621
        %v1672 = vadd.f32 %v1502, %v1565
        %v1673 = vadd.f32 %v1503, %v1622
        %v1674 = vadd.f32 %v1504, %v1623
        %v1675 = vadd.f32 %v1505, %v1571
        %v1676 = vadd.f32 %v1506, %v1624
        %v1677 = vadd.f32 %v1507, %v1625
        %v1678 = vadd.f32 %v1508, %v1577
        %v1679 = vadd.f32 %v1509, %v1626
        %v1680 = vadd.f32 %v1510, %v1627
        %v1681 = vadd.f32 %v1511, %v1583
        %v1682 = vadd.f32 %v1512, %v1628
        %v1683 = vadd.f32 %v1513, %v1629
        %v1684 = vadd.f32 %v1514, %v1589
        %v1685 = vadd.f32 %v1515, %v1630
        %v1686 = vadd.f32 %v1516, %v1631
        %v1687 = vadd.f32 %v1517, %v1595
        %v1688 = vadd.f32 %v1518, %v1632
        %v1689 = vadd.f32 %v1519, %v1633
        %v1690 = vadd.f32 %v1520, %v1601
        %v1691 = vadd.f32 %v1521, %v1634
        %v1692 = vadd.f32 %v1522, %v1635
        %v1693 = vadd.f32 %v1523, %v1607
        %v1694 = vadd.f32 %v1524, %v1636
        %v1695 = vadd.f32 %v1525, %v1637
        %v1696 = vadd.f32 %v1526, %v1613
        %v1697 = vadd.f32 %v1527, %v1638
        %v1698 = vadd.f32 %v1528, %v1639
        %v1699 = vadd.f32 %v1529, %v1619
        %v1700 = vmul.f32 %v1470, 0.01
        %v1701 = vmul.f32 %v1471, 0.01
        %v1702 = vmul.f32 %v1472, 0.01
        %v1703 = vmul.f32 %v1473, 0.01
        %v1704 = vmul.f32 %v1474, 0.01
        %v1705 = vmul.f32 %v1475, 0.01
        %v1706 = vmul.f32 %v1476, 0.01
        %v1707 = vmul.f32 %v1477, 0.01
        %v1708 = vmul.f32 %v1478, 0.01
        %v1709 = vmul.f32 %v1479, 0.01
        %v1710 = vmul.f32 %v1480, 0.01
        %v1711 = vmul.f32 %v1481, 0.01
        %v1712 = vmul.f32 %v1482, 0.01
        %v1713 = vmul.f32 %v1483, 0.01
        %v1714 = vmul.f32 %v1484, 0.01
        %v1715 = vmul.f32 %v1485, 0.01
        %v1716 = vmul.f32 %v1486, 0.01
        %v1717 = vmul.f32 %v1487, 0.01
        %v1718 = vmul.f32 %v1488, 0.01
        %v1719 = vmul.f32 %v1489, 0.01
        %v1720 = vmul.f32 %v1490, 0.01
        %v1721 = vmul.f32 %v1491, 0.01
        %v1722 = vmul.f32 %v1492, 0.01
        %v1723 = vmul.f32 %v1493, 0.01
        %v1724 = vmul.f32 %v1494, 0.01
        %v1725 = vmul.f32 %v1495, 0.01
        %v1726 = vmul.f32 %v1496, 0.01
        %v1727 = vmul.f32 %v1497, 0.01
        %v1728 = vmul.f32 %v1498, 0.01
        %v1729 = vmul.f32 %v1499, 0.01
        %1760 = vrot.lane.b32.xlu0 %v1700, 126
        %v1761 = vpop.permute.xlu0 %1760
        %1762 = vrot.lane.b32.xlu0 %v1701, 126
        %v1763 = vpop.permute.xlu0 %1762
        %1764 = vrot.lane.b32.xlu0 %v1702, 126
        %v1765 = vpop.permute.xlu0 %1764
        %1766 = vrot.lane.b32.xlu0 %v1703, 126
        %v1767 = vpop.permute.xlu0 %1766
        %1768 = vrot.lane.b32.xlu0 %v1704, 126
        %v1769 = vpop.permute.xlu0 %1768
        %1770 = vrot.lane.b32.xlu0 %v1705, 126
        %v1771 = vpop.permute.xlu0 %1770
        %1772 = vrot.lane.b32.xlu0 %v1706, 126
        %v1773 = vpop.permute.xlu0 %1772
        %1774 = vrot.lane.b32.xlu0 %v1707, 126
        %v1775 = vpop.permute.xlu0 %1774
        %1776 = vrot.lane.b32.xlu0 %v1708, 126
        %v1777 = vpop.permute.xlu0 %1776
        %1778 = vrot.lane.b32.xlu0 %v1709, 126
        %v1779 = vpop.permute.xlu0 %1778
        %1780 = vrot.lane.b32.xlu0 %v1710, 126
        %v1781 = vpop.permute.xlu0 %1780
        %1782 = vrot.lane.b32.xlu0 %v1711, 126
        %v1783 = vpop.permute.xlu0 %1782
        %1784 = vrot.lane.b32.xlu0 %v1712, 126
        %v1785 = vpop.permute.xlu0 %1784
        %1786 = vrot.lane.b32.xlu0 %v1713, 126
        %v1787 = vpop.permute.xlu0 %1786
        %1788 = vrot.lane.b32.xlu0 %v1714, 126
        %v1789 = vpop.permute.xlu0 %1788
        %1790 = vrot.lane.b32.xlu0 %v1715, 126
        %v1791 = vpop.permute.xlu0 %1790
        %1792 = vrot.lane.b32.xlu0 %v1716, 126
        %v1793 = vpop.permute.xlu0 %1792
        %1794 = vrot.lane.b32.xlu0 %v1717, 126
        %v1795 = vpop.permute.xlu0 %1794
        %1796 = vrot.lane.b32.xlu0 %v1718, 126
        %v1797 = vpop.permute.xlu0 %1796
        %1798 = vrot.lane.b32.xlu0 %v1719, 126
        %v1799 = vpop.permute.xlu0 %1798
        %1800 = vrot.lane.b32.xlu0 %v1720, 126
        %v1801 = vpop.permute.xlu0 %1800
        %1802 = vrot.lane.b32.xlu0 %v1721, 126
        %v1803 = vpop.permute.xlu0 %1802
        %1804 = vrot.lane.b32.xlu0 %v1722, 126
        %v1805 = vpop.permute.xlu0 %1804
        %1806 = vrot.lane.b32.xlu0 %v1723, 126
        %v1807 = vpop.permute.xlu0 %1806
        %1808 = vrot.lane.b32.xlu0 %v1724, 126
        %v1809 = vpop.permute.xlu0 %1808
        %1810 = vrot.lane.b32.xlu0 %v1725, 126
        %v1811 = vpop.permute.xlu0 %1810
        %1812 = vrot.lane.b32.xlu0 %v1726, 126
        %v1813 = vpop.permute.xlu0 %1812
        %1814 = vrot.lane.b32.xlu0 %v1727, 126
        %v1815 = vpop.permute.xlu0 %1814
        %1816 = vrot.lane.b32.xlu0 %v1728, 126
        %v1817 = vpop.permute.xlu0 %1816
        %1818 = vrot.lane.b32.xlu0 %v1729, 126
        %v1819 = vpop.permute.xlu0 %1818
        %vm1820 = vcmask 1031168
        %v1821 = vsel %vm1820, %v1761, %v1763
        %v1822 = vsel %vm1820, %v1763, %v1765
        %v1823 = vsel %vm1820, %v1767, %v1769
        %v1824 = vsel %vm1820, %v1769, %v1771
        %v1825 = vsel %vm1820, %v1773, %v1775
        %v1826 = vsel %vm1820, %v1775, %v1777
        %v1827 = vsel %vm1820, %v1779, %v1781
        %v1828 = vsel %vm1820, %v1781, %v1783
        %v1829 = vsel %vm1820, %v1785, %v1787
        %v1830 = vsel %vm1820, %v1787, %v1789
        %v1831 = vsel %vm1820, %v1791, %v1793
        %v1832 = vsel %vm1820, %v1793, %v1795
        %v1833 = vsel %vm1820, %v1797, %v1799
        %v1834 = vsel %vm1820, %v1799, %v1801
        %v1835 = vsel %vm1820, %v1803, %v1805
        %v1836 = vsel %vm1820, %v1805, %v1807
        %v1837 = vsel %vm1820, %v1809, %v1811
        %v1838 = vsel %vm1820, %v1811, %v1813
        %v1839 = vsel %vm1820, %v1815, %v1817
        %v1840 = vsel %vm1820, %v1817, %v1819
        %v1871 = vadd.f32 %v1670, %v1821
        %v1872 = vadd.f32 %v1671, %v1822
        %v1873 = vadd.f32 %v1672, %v1765
        %v1874 = vadd.f32 %v1673, %v1823
        %v1875 = vadd.f32 %v1674, %v1824
        %v1876 = vadd.f32 %v1675, %v1771
        %v1877 = vadd.f32 %v1676, %v1825
        %v1878 = vadd.f32 %v1677, %v1826
        %v1879 = vadd.f32 %v1678, %v1777
        %v1880 = vadd.f32 %v1679, %v1827
        %v1881 = vadd.f32 %v1680, %v1828
        %v1882 = vadd.f32 %v1681, %v1783
        %v1883 = vadd.f32 %v1682, %v1829
        %v1884 = vadd.f32 %v1683, %v1830
        %v1885 = vadd.f32 %v1684, %v1789
        %v1886 = vadd.f32 %v1685, %v1831
        %v1887 = vadd.f32 %v1686, %v1832
        %v1888 = vadd.f32 %v1687, %v1795
        %v1889 = vadd.f32 %v1688, %v1833
        %v1890 = vadd.f32 %v1689, %v1834
        %v1891 = vadd.f32 %v1690, %v1801
        %v1892 = vadd.f32 %v1691, %v1835
        %v1893 = vadd.f32 %v1692, %v1836
        %v1894 = vadd.f32 %v1693, %v1807
        %v1895 = vadd.f32 %v1694, %v1837
        %v1896 = vadd.f32 %v1695, %v1838
        %v1897 = vadd.f32 %v1696, %v1813
        %v1898 = vadd.f32 %v1697, %v1839
        %v1899 = vadd.f32 %v1698, %v1840
        %v1900 = vadd.f32 %v1699, %v1819
        %v1901 = vmul.f32 %v1470, -0.04
        %v1902 = vmul.f32 %v1471, -0.04
        %v1903 = vmul.f32 %v1472, -0.04
        %v1904 = vmul.f32 %v1473, -0.04
        %v1905 = vmul.f32 %v1474, -0.04
        %v1906 = vmul.f32 %v1475, -0.04
        %v1907 = vmul.f32 %v1476, -0.04
        %v1908 = vmul.f32 %v1477, -0.04
        %v1909 = vmul.f32 %v1478, -0.04
        %v1910 = vmul.f32 %v1479, -0.04
        %v1911 = vmul.f32 %v1480, -0.04
        %v1912 = vmul.f32 %v1481, -0.04
        %v1913 = vmul.f32 %v1482, -0.04
        %v1914 = vmul.f32 %v1483, -0.04
        %v1915 = vmul.f32 %v1484, -0.04
        %v1916 = vmul.f32 %v1485, -0.04
        %v1917 = vmul.f32 %v1486, -0.04
        %v1918 = vmul.f32 %v1487, -0.04
        %v1919 = vmul.f32 %v1488, -0.04
        %v1920 = vmul.f32 %v1489, -0.04
        %v1921 = vmul.f32 %v1490, -0.04
        %v1922 = vmul.f32 %v1491, -0.04
        %v1923 = vmul.f32 %v1492, -0.04
        %v1924 = vmul.f32 %v1493, -0.04
        %v1925 = vmul.f32 %v1494, -0.04
        %v1926 = vmul.f32 %v1495, -0.04
        %v1927 = vmul.f32 %v1496, -0.04
        %v1928 = vmul.f32 %v1497, -0.04
        %v1929 = vmul.f32 %v1498, -0.04
        %v1930 = vmul.f32 %v1499, -0.04
        %1961 = vrot.lane.b32.xlu0 %v1901, 125
        %v1962 = vpop.permute.xlu0 %1961
        %1963 = vrot.lane.b32.xlu0 %v1902, 125
        %v1964 = vpop.permute.xlu0 %1963
        %1965 = vrot.lane.b32.xlu0 %v1903, 125
        %v1966 = vpop.permute.xlu0 %1965
        %1967 = vrot.lane.b32.xlu0 %v1904, 125
        %v1968 = vpop.permute.xlu0 %1967
        %1969 = vrot.lane.b32.xlu0 %v1905, 125
        %v1970 = vpop.permute.xlu0 %1969
        %1971 = vrot.lane.b32.xlu0 %v1906, 125
        %v1972 = vpop.permute.xlu0 %1971
        %1973 = vrot.lane.b32.xlu0 %v1907, 125
        %v1974 = vpop.permute.xlu0 %1973
        %1975 = vrot.lane.b32.xlu0 %v1908, 125
        %v1976 = vpop.permute.xlu0 %1975
        %1977 = vrot.lane.b32.xlu0 %v1909, 125
        %v1978 = vpop.permute.xlu0 %1977
        %1979 = vrot.lane.b32.xlu0 %v1910, 125
        %v1980 = vpop.permute.xlu0 %1979
        %1981 = vrot.lane.b32.xlu0 %v1911, 125
        %v1982 = vpop.permute.xlu0 %1981
        %1983 = vrot.lane.b32.xlu0 %v1912, 125
        %v1984 = vpop.permute.xlu0 %1983
        %1985 = vrot.lane.b32.xlu0 %v1913, 125
        %v1986 = vpop.permute.xlu0 %1985
        %1987 = vrot.lane.b32.xlu0 %v1914, 125
        %v1988 = vpop.permute.xlu0 %1987
        %1989 = vrot.lane.b32.xlu0 %v1915, 125
        %v1990 = vpop.permute.xlu0 %1989
        %1991 = vrot.lane.b32.xlu0 %v1916, 125
        %v1992 = vpop.permute.xlu0 %1991
        %1993 = vrot.lane.b32.xlu0 %v1917, 125
        %v1994 = vpop.permute.xlu0 %1993
        %1995 = vrot.lane.b32.xlu0 %v1918, 125
        %v1996 = vpop.permute.xlu0 %1995
        %1997 = vrot.lane.b32.xlu0 %v1919, 125
        %v1998 = vpop.permute.xlu0 %1997
        %1999 = vrot.lane.b32.xlu0 %v1920, 125
        %v2000 = vpop.permute.xlu0 %1999
        %2001 = vrot.lane.b32.xlu0 %v1921, 125
        %v2002 = vpop.permute.xlu0 %2001
        %2003 = vrot.lane.b32.xlu0 %v1922, 125
        %v2004 = vpop.permute.xlu0 %2003
        %2005 = vrot.lane.b32.xlu0 %v1923, 125
        %v2006 = vpop.permute.xlu0 %2005
        %2007 = vrot.lane.b32.xlu0 %v1924, 125
        %v2008 = vpop.permute.xlu0 %2007
        %2009 = vrot.lane.b32.xlu0 %v1925, 125
        %v2010 = vpop.permute.xlu0 %2009
        %2011 = vrot.lane.b32.xlu0 %v1926, 125
        %v2012 = vpop.permute.xlu0 %2011
        %2013 = vrot.lane.b32.xlu0 %v1927, 125
        %v2014 = vpop.permute.xlu0 %2013
        %2015 = vrot.lane.b32.xlu0 %v1928, 125
        %v2016 = vpop.permute.xlu0 %2015
        %2017 = vrot.lane.b32.xlu0 %v1929, 125
        %v2018 = vpop.permute.xlu0 %2017
        %2019 = vrot.lane.b32.xlu0 %v1930, 125
        %v2020 = vpop.permute.xlu0 %2019
        %v2021 = vsel %vm1036, %v1962, %v1964
        %v2022 = vsel %vm1036, %v1964, %v1966
        %v2023 = vsel %vm1036, %v1968, %v1970
        %v2024 = vsel %vm1036, %v1970, %v1972
        %v2025 = vsel %vm1036, %v1974, %v1976
        %v2026 = vsel %vm1036, %v1976, %v1978
        %v2027 = vsel %vm1036, %v1980, %v1982
        %v2028 = vsel %vm1036, %v1982, %v1984
        %v2029 = vsel %vm1036, %v1986, %v1988
        %v2030 = vsel %vm1036, %v1988, %v1990
        %v2031 = vsel %vm1036, %v1992, %v1994
        %v2032 = vsel %vm1036, %v1994, %v1996
        %v2033 = vsel %vm1036, %v1998, %v2000
        %v2034 = vsel %vm1036, %v2000, %v2002
        %v2035 = vsel %vm1036, %v2004, %v2006
        %v2036 = vsel %vm1036, %v2006, %v2008
        %v2037 = vsel %vm1036, %v2010, %v2012
        %v2038 = vsel %vm1036, %v2012, %v2014
        %v2039 = vsel %vm1036, %v2016, %v2018
        %v2040 = vsel %vm1036, %v2018, %v2020
        %v2071 = vadd.f32 %v1871, %v2021
        %v2072 = vadd.f32 %v1872, %v2022
        %v2073 = vadd.f32 %v1873, %v1966
        %v2074 = vadd.f32 %v1874, %v2023
        %v2075 = vadd.f32 %v1875, %v2024
        %v2076 = vadd.f32 %v1876, %v1972
        %v2077 = vadd.f32 %v1877, %v2025
        %v2078 = vadd.f32 %v1878, %v2026
        %v2079 = vadd.f32 %v1879, %v1978
        %v2080 = vadd.f32 %v1880, %v2027
        %v2081 = vadd.f32 %v1881, %v2028
        %v2082 = vadd.f32 %v1882, %v1984
        %v2083 = vadd.f32 %v1883, %v2029
        %v2084 = vadd.f32 %v1884, %v2030
        %v2085 = vadd.f32 %v1885, %v1990
        %v2086 = vadd.f32 %v1886, %v2031
        %v2087 = vadd.f32 %v1887, %v2032
        %v2088 = vadd.f32 %v1888, %v1996
        %v2089 = vadd.f32 %v1889, %v2033
        %v2090 = vadd.f32 %v1890, %v2034
        %v2091 = vadd.f32 %v1891, %v2002
        %v2092 = vadd.f32 %v1892, %v2035
        %v2093 = vadd.f32 %v1893, %v2036
        %v2094 = vadd.f32 %v1894, %v2008
        %v2095 = vadd.f32 %v1895, %v2037
        %v2096 = vadd.f32 %v1896, %v2038
        %v2097 = vadd.f32 %v1897, %v2014
        %v2098 = vadd.f32 %v1898, %v2039
        %v2099 = vadd.f32 %v1899, %v2040
        %v2100 = vadd.f32 %v1900, %v2020
        %v2101 = vmul.f32 %v1471, -0.1
        %v2102 = vmul.f32 %v1472, -0.1
        %v2103 = vmul.f32 %v1474, -0.1
        %v2104 = vmul.f32 %v1475, -0.1
        %v2105 = vmul.f32 %v1477, -0.1
        %v2106 = vmul.f32 %v1478, -0.1
        %v2107 = vmul.f32 %v1480, -0.1
        %v2108 = vmul.f32 %v1481, -0.1
        %v2109 = vmul.f32 %v1483, -0.1
        %v2110 = vmul.f32 %v1484, -0.1
        %v2111 = vmul.f32 %v1486, -0.1
        %v2112 = vmul.f32 %v1487, -0.1
        %v2113 = vmul.f32 %v1489, -0.1
        %v2114 = vmul.f32 %v1490, -0.1
        %v2115 = vmul.f32 %v1492, -0.1
        %v2116 = vmul.f32 %v1493, -0.1
        %v2117 = vmul.f32 %v1495, -0.1
        %v2118 = vmul.f32 %v1496, -0.1
        %v2119 = vmul.f32 %v1498, -0.1
        %v2120 = vmul.f32 %v1499, -0.1
        %2141 = vrot.lane.b32.xlu0 %v2101, 124
        %v2142 = vpop.permute.xlu0 %2141
        %2143 = vrot.lane.b32.xlu0 %v2102, 124
        %v2144 = vpop.permute.xlu0 %2143
        %2145 = vrot.lane.b32.xlu0 %v2103, 124
        %v2146 = vpop.permute.xlu0 %2145
        %2147 = vrot.lane.b32.xlu0 %v2104, 124
        %v2148 = vpop.permute.xlu0 %2147
        %2149 = vrot.lane.b32.xlu0 %v2105, 124
        %v2150 = vpop.permute.xlu0 %2149
        %2151 = vrot.lane.b32.xlu0 %v2106, 124
        %v2152 = vpop.permute.xlu0 %2151
        %2153 = vrot.lane.b32.xlu0 %v2107, 124
        %v2154 = vpop.permute.xlu0 %2153
        %2155 = vrot.lane.b32.xlu0 %v2108, 124
        %v2156 = vpop.permute.xlu0 %2155
        %2157 = vrot.lane.b32.xlu0 %v2109, 124
        %v2158 = vpop.permute.xlu0 %2157
        %2159 = vrot.lane.b32.xlu0 %v2110, 124
        %v2160 = vpop.permute.xlu0 %2159
        %2161 = vrot.lane.b32.xlu0 %v2111, 124
        %v2162 = vpop.permute.xlu0 %2161
        %2163 = vrot.lane.b32.xlu0 %v2112, 124
        %v2164 = vpop.permute.xlu0 %2163
        %2165 = vrot.lane.b32.xlu0 %v2113, 124
        %v2166 = vpop.permute.xlu0 %2165
        %2167 = vrot.lane.b32.xlu0 %v2114, 124
        %v2168 = vpop.permute.xlu0 %2167
        %2169 = vrot.lane.b32.xlu0 %v2115, 124
        %v2170 = vpop.permute.xlu0 %2169
        %2171 = vrot.lane.b32.xlu0 %v2116, 124
        %v2172 = vpop.permute.xlu0 %2171
        %2173 = vrot.lane.b32.xlu0 %v2117, 124
        %v2174 = vpop.permute.xlu0 %2173
        %2175 = vrot.lane.b32.xlu0 %v2118, 124
        %v2176 = vpop.permute.xlu0 %2175
        %2177 = vrot.lane.b32.xlu0 %v2119, 124
        %v2178 = vpop.permute.xlu0 %2177
        %2179 = vrot.lane.b32.xlu0 %v2120, 124
        %v2180 = vpop.permute.xlu0 %2179
        %v2181 = vsel %vm1237, %v2142, %v2144
        %v2182 = vsel %vm1237, %v2146, %v2148
        %v2183 = vsel %vm1237, %v2150, %v2152
        %v2184 = vsel %vm1237, %v2154, %v2156
        %v2185 = vsel %vm1237, %v2158, %v2160
        %v2186 = vsel %vm1237, %v2162, %v2164
        %v2187 = vsel %vm1237, %v2166, %v2168
        %v2188 = vsel %vm1237, %v2170, %v2172
        %v2189 = vsel %vm1237, %v2174, %v2176
        %v2190 = vsel %vm1237, %v2178, %v2180
        %v2221 = vadd.f32 %v2071, %v2142
        %v2222 = vadd.f32 %v2072, %v2181
        %v2223 = vadd.f32 %v2073, %v2144
        %v2224 = vadd.f32 %v2074, %v2146
        %v2225 = vadd.f32 %v2075, %v2182
        %v2226 = vadd.f32 %v2076, %v2148
        %v2227 = vadd.f32 %v2077, %v2150
        %v2228 = vadd.f32 %v2078, %v2183
        %v2229 = vadd.f32 %v2079, %v2152
        %v2230 = vadd.f32 %v2080, %v2154
        %v2231 = vadd.f32 %v2081, %v2184
        %v2232 = vadd.f32 %v2082, %v2156
        %v2233 = vadd.f32 %v2083, %v2158
        %v2234 = vadd.f32 %v2084, %v2185
        %v2235 = vadd.f32 %v2085, %v2160
        %v2236 = vadd.f32 %v2086, %v2162
        %v2237 = vadd.f32 %v2087, %v2186
        %v2238 = vadd.f32 %v2088, %v2164
        %v2239 = vadd.f32 %v2089, %v2166
        %v2240 = vadd.f32 %v2090, %v2187
        %v2241 = vadd.f32 %v2091, %v2168
        %v2242 = vadd.f32 %v2092, %v2170
        %v2243 = vadd.f32 %v2093, %v2188
        %v2244 = vadd.f32 %v2094, %v2172
        %v2245 = vadd.f32 %v2095, %v2174
        %v2246 = vadd.f32 %v2096, %v2189
        %v2247 = vadd.f32 %v2097, %v2176
        %v2248 = vadd.f32 %v2098, %v2178
        %v2249 = vadd.f32 %v2099, %v2190
        %v2250 = vadd.f32 %v2100, %v2180
        %v2251 = vld [vmem:[#allocation2 + $0x8] sm:$0xff]
        %v2252 = vld [vmem:[#allocation2 + $0x10] sm:$0xff]
        %v2253 = vld [vmem:[#allocation2 + $0x18] sm:$0xff]
        %v2254 = vld [vmem:[#allocation2 + $0x28] sm:$0xff]
        %v2255 = vld [vmem:[#allocation2 + $0x30] sm:$0xff]
        %v2256 = vld [vmem:[#allocation2 + $0x38] sm:$0xff]
        %v2257 = vld [vmem:[#allocation2 + $0x48] sm:$0xff]
        %v2258 = vld [vmem:[#allocation2 + $0x50] sm:$0xff]
        %v2259 = vld [vmem:[#allocation2 + $0x58] sm:$0xff]
        %v2260 = vld [vmem:[#allocation2 + $0x68] sm:$0xff]
        %v2261 = vld [vmem:[#allocation2 + $0x70] sm:$0xff]
        %v2262 = vld [vmem:[#allocation2 + $0x78] sm:$0xff]
        %v2263 = vld [vmem:[#allocation2 + $0x88] sm:$0xff]
        %v2264 = vld [vmem:[#allocation2 + $0x90] sm:$0xff]
        %v2265 = vld [vmem:[#allocation2 + $0x98] sm:$0xff]
        %v2266 = vld [vmem:[#allocation2 + $0xa8] sm:$0xff]
        %v2267 = vld [vmem:[#allocation2 + $0xb0] sm:$0xff]
        %v2268 = vld [vmem:[#allocation2 + $0xb8] sm:$0xff]
        %v2269 = vld [vmem:[#allocation2 + $0xc8] sm:$0xff]
        %v2270 = vld [vmem:[#allocation2 + $0xd0] sm:$0xff]
        %v2271 = vld [vmem:[#allocation2 + $0xd8] sm:$0xff]
        %v2272 = vld [vmem:[#allocation2 + $0xe8] sm:$0xff]
        %v2273 = vld [vmem:[#allocation2 + $0xf0] sm:$0xff]
        %v2274 = vld [vmem:[#allocation2 + $0xf8] sm:$0xff]
        %v2275 = vld [vmem:[#allocation2 + $0x108] sm:$0xff]
        %v2276 = vld [vmem:[#allocation2 + $0x110] sm:$0xff]
        %v2277 = vld [vmem:[#allocation2 + $0x118] sm:$0xff]
        %v2278 = vld [vmem:[#allocation2 + $0x128] sm:$0xff]
        %v2279 = vld [vmem:[#allocation2 + $0x130] sm:$0xff]
        %v2280 = vld [vmem:[#allocation2 + $0x138] sm:$0xff]
        %v2281 = vmul.f32 %v2251, -0.04
        %v2282 = vmul.f32 %v2252, -0.04
        %v2283 = vmul.f32 %v2253, -0.04
        %v2284 = vmul.f32 %v2254, -0.04
        %v2285 = vmul.f32 %v2255, -0.04
        %v2286 = vmul.f32 %v2256, -0.04
        %v2287 = vmul.f32 %v2257, -0.04
        %v2288 = vmul.f32 %v2258, -0.04
        %v2289 = vmul.f32 %v2259, -0.04
        %v2290 = vmul.f32 %v2260, -0.04
        %v2291 = vmul.f32 %v2261, -0.04
        %v2292 = vmul.f32 %v2262, -0.04
        %v2293 = vmul.f32 %v2263, -0.04
        %v2294 = vmul.f32 %v2264, -0.04
        %v2295 = vmul.f32 %v2265, -0.04
        %v2296 = vmul.f32 %v2266, -0.04
        %v2297 = vmul.f32 %v2267, -0.04
        %v2298 = vmul.f32 %v2268, -0.04
        %v2299 = vmul.f32 %v2269, -0.04
        %v2300 = vmul.f32 %v2270, -0.04
        %v2301 = vmul.f32 %v2271, -0.04
        %v2302 = vmul.f32 %v2272, -0.04
        %v2303 = vmul.f32 %v2273, -0.04
        %v2304 = vmul.f32 %v2274, -0.04
        %v2305 = vmul.f32 %v2275, -0.04
        %v2306 = vmul.f32 %v2276, -0.04
        %v2307 = vmul.f32 %v2277, -0.04
        %v2308 = vmul.f32 %v2278, -0.04
        %v2309 = vmul.f32 %v2279, -0.04
        %v2310 = vmul.f32 %v2280, -0.04
        %2341 = vrot.lane.b32.xlu0 %v2281, 123
        %v2342 = vpop.permute.xlu0 %2341
        %2343 = vrot.lane.b32.xlu0 %v2282, 123
        %v2344 = vpop.permute.xlu0 %2343
        %2345 = vrot.lane.b32.xlu0 %v2283, 123
        %v2346 = vpop.permute.xlu0 %2345
        %2347 = vrot.lane.b32.xlu0 %v2284, 123
        %v2348 = vpop.permute.xlu0 %2347
        %2349 = vrot.lane.b32.xlu0 %v2285, 123
        %v2350 = vpop.permute.xlu0 %2349
        %2351 = vrot.lane.b32.xlu0 %v2286, 123
        %v2352 = vpop.permute.xlu0 %2351
        %2353 = vrot.lane.b32.xlu0 %v2287, 123
        %v2354 = vpop.permute.xlu0 %2353
        %2355 = vrot.lane.b32.xlu0 %v2288, 123
        %v2356 = vpop.permute.xlu0 %2355
        %2357 = vrot.lane.b32.xlu0 %v2289, 123
        %v2358 = vpop.permute.xlu0 %2357
        %2359 = vrot.lane.b32.xlu0 %v2290, 123
        %v2360 = vpop.permute.xlu0 %2359
        %2361 = vrot.lane.b32.xlu0 %v2291, 123
        %v2362 = vpop.permute.xlu0 %2361
        %2363 = vrot.lane.b32.xlu0 %v2292, 123
        %v2364 = vpop.permute.xlu0 %2363
        %2365 = vrot.lane.b32.xlu0 %v2293, 123
        %v2366 = vpop.permute.xlu0 %2365
        %2367 = vrot.lane.b32.xlu0 %v2294, 123
        %v2368 = vpop.permute.xlu0 %2367
        %2369 = vrot.lane.b32.xlu0 %v2295, 123
        %v2370 = vpop.permute.xlu0 %2369
        %2371 = vrot.lane.b32.xlu0 %v2296, 123
        %v2372 = vpop.permute.xlu0 %2371
        %2373 = vrot.lane.b32.xlu0 %v2297, 123
        %v2374 = vpop.permute.xlu0 %2373
        %2375 = vrot.lane.b32.xlu0 %v2298, 123
        %v2376 = vpop.permute.xlu0 %2375
        %2377 = vrot.lane.b32.xlu0 %v2299, 123
        %v2378 = vpop.permute.xlu0 %2377
        %2379 = vrot.lane.b32.xlu0 %v2300, 123
        %v2380 = vpop.permute.xlu0 %2379
        %2381 = vrot.lane.b32.xlu0 %v2301, 123
        %v2382 = vpop.permute.xlu0 %2381
        %2383 = vrot.lane.b32.xlu0 %v2302, 123
        %v2384 = vpop.permute.xlu0 %2383
        %2385 = vrot.lane.b32.xlu0 %v2303, 123
        %v2386 = vpop.permute.xlu0 %2385
        %2387 = vrot.lane.b32.xlu0 %v2304, 123
        %v2388 = vpop.permute.xlu0 %2387
        %2389 = vrot.lane.b32.xlu0 %v2305, 123
        %v2390 = vpop.permute.xlu0 %2389
        %2391 = vrot.lane.b32.xlu0 %v2306, 123
        %v2392 = vpop.permute.xlu0 %2391
        %2393 = vrot.lane.b32.xlu0 %v2307, 123
        %v2394 = vpop.permute.xlu0 %2393
        %2395 = vrot.lane.b32.xlu0 %v2308, 123
        %v2396 = vpop.permute.xlu0 %2395
        %2397 = vrot.lane.b32.xlu0 %v2309, 123
        %v2398 = vpop.permute.xlu0 %2397
        %2399 = vrot.lane.b32.xlu0 %v2310, 123
        %v2400 = vpop.permute.xlu0 %2399
        %vm2401 = vcmask 1006592
        %v2402 = vsel %vm2401, %v2342, %v2344
        %v2403 = vsel %vm2401, %v2344, %v2346
        %v2404 = vsel %vm2401, %v2348, %v2350
        %v2405 = vsel %vm2401, %v2350, %v2352
        %v2406 = vsel %vm2401, %v2354, %v2356
        %v2407 = vsel %vm2401, %v2356, %v2358
        %v2408 = vsel %vm2401, %v2360, %v2362
        %v2409 = vsel %vm2401, %v2362, %v2364
        %v2410 = vsel %vm2401, %v2366, %v2368
        %v2411 = vsel %vm2401, %v2368, %v2370
        %v2412 = vsel %vm2401, %v2372, %v2374
        %v2413 = vsel %vm2401, %v2374, %v2376
        %v2414 = vsel %vm2401, %v2378, %v2380
        %v2415 = vsel %vm2401, %v2380, %v2382
        %v2416 = vsel %vm2401, %v2384, %v2386
        %v2417 = vsel %vm2401, %v2386, %v2388
        %v2418 = vsel %vm2401, %v2390, %v2392
        %v2419 = vsel %vm2401, %v2392, %v2394
        %v2420 = vsel %vm2401, %v2396, %v2398
        %v2421 = vsel %vm2401, %v2398, %v2400
        %v2452 = vadd.f32 %v2221, %v2342
        %v2453 = vadd.f32 %v2222, %v2402
        %v2454 = vadd.f32 %v2223, %v2403
        %v2455 = vadd.f32 %v2224, %v2348
        %v2456 = vadd.f32 %v2225, %v2404
        %v2457 = vadd.f32 %v2226, %v2405
        %v2458 = vadd.f32 %v2227, %v2354
        %v2459 = vadd.f32 %v2228, %v2406
        %v2460 = vadd.f32 %v2229, %v2407
        %v2461 = vadd.f32 %v2230, %v2360
        %v2462 = vadd.f32 %v2231, %v2408
        %v2463 = vadd.f32 %v2232, %v2409
        %v2464 = vadd.f32 %v2233, %v2366
        %v2465 = vadd.f32 %v2234, %v2410
        %v2466 = vadd.f32 %v2235, %v2411
        %v2467 = vadd.f32 %v2236, %v2372
        %v2468 = vadd.f32 %v2237, %v2412
        %v2469 = vadd.f32 %v2238, %v2413
        %v2470 = vadd.f32 %v2239, %v2378
        %v2471 = vadd.f32 %v2240, %v2414
        %v2472 = vadd.f32 %v2241, %v2415
        %v2473 = vadd.f32 %v2242, %v2384
        %v2474 = vadd.f32 %v2243, %v2416
        %v2475 = vadd.f32 %v2244, %v2417
        %v2476 = vadd.f32 %v2245, %v2390
        %v2477 = vadd.f32 %v2246, %v2418
        %v2478 = vadd.f32 %v2247, %v2419
        %v2479 = vadd.f32 %v2248, %v2396
        %v2480 = vadd.f32 %v2249, %v2420
        %v2481 = vadd.f32 %v2250, %v2421
        %v2482 = vmul.f32 %v2251, 0.01
        %v2483 = vmul.f32 %v2252, 0.01
        %v2484 = vmul.f32 %v2253, 0.01
        %v2485 = vmul.f32 %v2254, 0.01
        %v2486 = vmul.f32 %v2255, 0.01
        %v2487 = vmul.f32 %v2256, 0.01
        %v2488 = vmul.f32 %v2257, 0.01
        %v2489 = vmul.f32 %v2258, 0.01
        %v2490 = vmul.f32 %v2259, 0.01
        %v2491 = vmul.f32 %v2260, 0.01
        %v2492 = vmul.f32 %v2261, 0.01
        %v2493 = vmul.f32 %v2262, 0.01
        %v2494 = vmul.f32 %v2263, 0.01
        %v2495 = vmul.f32 %v2264, 0.01
        %v2496 = vmul.f32 %v2265, 0.01
        %v2497 = vmul.f32 %v2266, 0.01
        %v2498 = vmul.f32 %v2267, 0.01
        %v2499 = vmul.f32 %v2268, 0.01
        %v2500 = vmul.f32 %v2269, 0.01
        %v2501 = vmul.f32 %v2270, 0.01
        %v2502 = vmul.f32 %v2271, 0.01
        %v2503 = vmul.f32 %v2272, 0.01
        %v2504 = vmul.f32 %v2273, 0.01
        %v2505 = vmul.f32 %v2274, 0.01
        %v2506 = vmul.f32 %v2275, 0.01
        %v2507 = vmul.f32 %v2276, 0.01
        %v2508 = vmul.f32 %v2277, 0.01
        %v2509 = vmul.f32 %v2278, 0.01
        %v2510 = vmul.f32 %v2279, 0.01
        %v2511 = vmul.f32 %v2280, 0.01
        %2542 = vrot.lane.b32.xlu0 %v2482, 122
        %v2543 = vpop.permute.xlu0 %2542
        %2544 = vrot.lane.b32.xlu0 %v2483, 122
        %v2545 = vpop.permute.xlu0 %2544
        %2546 = vrot.lane.b32.xlu0 %v2484, 122
        %v2547 = vpop.permute.xlu0 %2546
        %2548 = vrot.lane.b32.xlu0 %v2485, 122
        %v2549 = vpop.permute.xlu0 %2548
        %2550 = vrot.lane.b32.xlu0 %v2486, 122
        %v2551 = vpop.permute.xlu0 %2550
        %2552 = vrot.lane.b32.xlu0 %v2487, 122
        %v2553 = vpop.permute.xlu0 %2552
        %2554 = vrot.lane.b32.xlu0 %v2488, 122
        %v2555 = vpop.permute.xlu0 %2554
        %2556 = vrot.lane.b32.xlu0 %v2489, 122
        %v2557 = vpop.permute.xlu0 %2556
        %2558 = vrot.lane.b32.xlu0 %v2490, 122
        %v2559 = vpop.permute.xlu0 %2558
        %2560 = vrot.lane.b32.xlu0 %v2491, 122
        %v2561 = vpop.permute.xlu0 %2560
        %2562 = vrot.lane.b32.xlu0 %v2492, 122
        %v2563 = vpop.permute.xlu0 %2562
        %2564 = vrot.lane.b32.xlu0 %v2493, 122
        %v2565 = vpop.permute.xlu0 %2564
        %2566 = vrot.lane.b32.xlu0 %v2494, 122
        %v2567 = vpop.permute.xlu0 %2566
        %2568 = vrot.lane.b32.xlu0 %v2495, 122
        %v2569 = vpop.permute.xlu0 %2568
        %2570 = vrot.lane.b32.xlu0 %v2496, 122
        %v2571 = vpop.permute.xlu0 %2570
        %2572 = vrot.lane.b32.xlu0 %v2497, 122
        %v2573 = vpop.permute.xlu0 %2572
        %2574 = vrot.lane.b32.xlu0 %v2498, 122
        %v2575 = vpop.permute.xlu0 %2574
        %2576 = vrot.lane.b32.xlu0 %v2499, 122
        %v2577 = vpop.permute.xlu0 %2576
        %2578 = vrot.lane.b32.xlu0 %v2500, 122
        %v2579 = vpop.permute.xlu0 %2578
        %2580 = vrot.lane.b32.xlu0 %v2501, 122
        %v2581 = vpop.permute.xlu0 %2580
        %2582 = vrot.lane.b32.xlu0 %v2502, 122
        %v2583 = vpop.permute.xlu0 %2582
        %2584 = vrot.lane.b32.xlu0 %v2503, 122
        %v2585 = vpop.permute.xlu0 %2584
        %2586 = vrot.lane.b32.xlu0 %v2504, 122
        %v2587 = vpop.permute.xlu0 %2586
        %2588 = vrot.lane.b32.xlu0 %v2505, 122
        %v2589 = vpop.permute.xlu0 %2588
        %2590 = vrot.lane.b32.xlu0 %v2506, 122
        %v2591 = vpop.permute.xlu0 %2590
        %2592 = vrot.lane.b32.xlu0 %v2507, 122
        %v2593 = vpop.permute.xlu0 %2592
        %2594 = vrot.lane.b32.xlu0 %v2508, 122
        %v2595 = vpop.permute.xlu0 %2594
        %2596 = vrot.lane.b32.xlu0 %v2509, 122
        %v2597 = vpop.permute.xlu0 %2596
        %2598 = vrot.lane.b32.xlu0 %v2510, 122
        %v2599 = vpop.permute.xlu0 %2598
        %2600 = vrot.lane.b32.xlu0 %v2511, 122
        %v2601 = vpop.permute.xlu0 %2600
        %vm2602 = vcmask 998400
        %v2603 = vsel %vm2602, %v2543, %v2545
        %v2604 = vsel %vm2602, %v2545, %v2547
        %v2605 = vsel %vm2602, %v2549, %v2551
        %v2606 = vsel %vm2602, %v2551, %v2553
        %v2607 = vsel %vm2602, %v2555, %v2557
        %v2608 = vsel %vm2602, %v2557, %v2559
        %v2609 = vsel %vm2602, %v2561, %v2563
        %v2610 = vsel %vm2602, %v2563, %v2565
        %v2611 = vsel %vm2602, %v2567, %v2569
        %v2612 = vsel %vm2602, %v2569, %v2571
        %v2613 = vsel %vm2602, %v2573, %v2575
        %v2614 = vsel %vm2602, %v2575, %v2577
        %v2615 = vsel %vm2602, %v2579, %v2581
        %v2616 = vsel %vm2602, %v2581, %v2583
        %v2617 = vsel %vm2602, %v2585, %v2587
        %v2618 = vsel %vm2602, %v2587, %v2589
        %v2619 = vsel %vm2602, %v2591, %v2593
        %v2620 = vsel %vm2602, %v2593, %v2595
        %v2621 = vsel %vm2602, %v2597, %v2599
        %v2622 = vsel %vm2602, %v2599, %v2601
        %v2653 = vadd.f32 %v2452, %v2543
        %v2654 = vadd.f32 %v2453, %v2603
        %v2655 = vadd.f32 %v2454, %v2604
        %v2656 = vadd.f32 %v2455, %v2549
        %v2657 = vadd.f32 %v2456, %v2605
        %v2658 = vadd.f32 %v2457, %v2606
        %v2659 = vadd.f32 %v2458, %v2555
        %v2660 = vadd.f32 %v2459, %v2607
        %v2661 = vadd.f32 %v2460, %v2608
        %v2662 = vadd.f32 %v2461, %v2561
        %v2663 = vadd.f32 %v2462, %v2609
        %v2664 = vadd.f32 %v2463, %v2610
        %v2665 = vadd.f32 %v2464, %v2567
        %v2666 = vadd.f32 %v2465, %v2611
        %v2667 = vadd.f32 %v2466, %v2612
        %v2668 = vadd.f32 %v2467, %v2573
        %v2669 = vadd.f32 %v2468, %v2613
        %v2670 = vadd.f32 %v2469, %v2614
        %v2671 = vadd.f32 %v2470, %v2579
        %v2672 = vadd.f32 %v2471, %v2615
        %v2673 = vadd.f32 %v2472, %v2616
        %v2674 = vadd.f32 %v2473, %v2585
        %v2675 = vadd.f32 %v2474, %v2617
        %v2676 = vadd.f32 %v2475, %v2618
        %v2677 = vadd.f32 %v2476, %v2591
        %v2678 = vadd.f32 %v2477, %v2619
        %v2679 = vadd.f32 %v2478, %v2620
        %v2680 = vadd.f32 %v2479, %v2597
        %v2681 = vadd.f32 %v2480, %v2621
        %v2682 = vadd.f32 %v2481, %v2622
        %v2683 = vmul.f32 %v2251, 0.04
        %v2684 = vmul.f32 %v2252, 0.04
        %v2685 = vmul.f32 %v2253, 0.04
        %v2686 = vmul.f32 %v2254, 0.04
        %v2687 = vmul.f32 %v2255, 0.04
        %v2688 = vmul.f32 %v2256, 0.04
        %v2689 = vmul.f32 %v2257, 0.04
        %v2690 = vmul.f32 %v2258, 0.04
        %v2691 = vmul.f32 %v2259, 0.04
        %v2692 = vmul.f32 %v2260, 0.04
        %v2693 = vmul.f32 %v2261, 0.04
        %v2694 = vmul.f32 %v2262, 0.04
        %v2695 = vmul.f32 %v2263, 0.04
        %v2696 = vmul.f32 %v2264, 0.04
        %v2697 = vmul.f32 %v2265, 0.04
        %v2698 = vmul.f32 %v2266, 0.04
        %v2699 = vmul.f32 %v2267, 0.04
        %v2700 = vmul.f32 %v2268, 0.04
        %v2701 = vmul.f32 %v2269, 0.04
        %v2702 = vmul.f32 %v2270, 0.04
        %v2703 = vmul.f32 %v2271, 0.04
        %v2704 = vmul.f32 %v2272, 0.04
        %v2705 = vmul.f32 %v2273, 0.04
        %v2706 = vmul.f32 %v2274, 0.04
        %v2707 = vmul.f32 %v2275, 0.04
        %v2708 = vmul.f32 %v2276, 0.04
        %v2709 = vmul.f32 %v2277, 0.04
        %v2710 = vmul.f32 %v2278, 0.04
        %v2711 = vmul.f32 %v2279, 0.04
        %v2712 = vmul.f32 %v2280, 0.04
        %2743 = vrot.lane.b32.xlu0 %v2683, 121
        %v2744 = vpop.permute.xlu0 %2743
        %2745 = vrot.lane.b32.xlu0 %v2684, 121
        %v2746 = vpop.permute.xlu0 %2745
        %2747 = vrot.lane.b32.xlu0 %v2685, 121
        %v2748 = vpop.permute.xlu0 %2747
        %2749 = vrot.lane.b32.xlu0 %v2686, 121
        %v2750 = vpop.permute.xlu0 %2749
        %2751 = vrot.lane.b32.xlu0 %v2687, 121
        %v2752 = vpop.permute.xlu0 %2751
        %2753 = vrot.lane.b32.xlu0 %v2688, 121
        %v2754 = vpop.permute.xlu0 %2753
        %2755 = vrot.lane.b32.xlu0 %v2689, 121
        %v2756 = vpop.permute.xlu0 %2755
        %2757 = vrot.lane.b32.xlu0 %v2690, 121
        %v2758 = vpop.permute.xlu0 %2757
        %2759 = vrot.lane.b32.xlu0 %v2691, 121
        %v2760 = vpop.permute.xlu0 %2759
        %2761 = vrot.lane.b32.xlu0 %v2692, 121
        %v2762 = vpop.permute.xlu0 %2761
        %2763 = vrot.lane.b32.xlu0 %v2693, 121
        %v2764 = vpop.permute.xlu0 %2763
        %2765 = vrot.lane.b32.xlu0 %v2694, 121
        %v2766 = vpop.permute.xlu0 %2765
        %2767 = vrot.lane.b32.xlu0 %v2695, 121
        %v2768 = vpop.permute.xlu0 %2767
        %2769 = vrot.lane.b32.xlu0 %v2696, 121
        %v2770 = vpop.permute.xlu0 %2769
        %2771 = vrot.lane.b32.xlu0 %v2697, 121
        %v2772 = vpop.permute.xlu0 %2771
        %2773 = vrot.lane.b32.xlu0 %v2698, 121
        %v2774 = vpop.permute.xlu0 %2773
        %2775 = vrot.lane.b32.xlu0 %v2699, 121
        %v2776 = vpop.permute.xlu0 %2775
        %2777 = vrot.lane.b32.xlu0 %v2700, 121
        %v2778 = vpop.permute.xlu0 %2777
        %2779 = vrot.lane.b32.xlu0 %v2701, 121
        %v2780 = vpop.permute.xlu0 %2779
        %2781 = vrot.lane.b32.xlu0 %v2702, 121
        %v2782 = vpop.permute.xlu0 %2781
        %2783 = vrot.lane.b32.xlu0 %v2703, 121
        %v2784 = vpop.permute.xlu0 %2783
        %2785 = vrot.lane.b32.xlu0 %v2704, 121
        %v2786 = vpop.permute.xlu0 %2785
        %2787 = vrot.lane.b32.xlu0 %v2705, 121
        %v2788 = vpop.permute.xlu0 %2787
        %2789 = vrot.lane.b32.xlu0 %v2706, 121
        %v2790 = vpop.permute.xlu0 %2789
        %2791 = vrot.lane.b32.xlu0 %v2707, 121
        %v2792 = vpop.permute.xlu0 %2791
        %2793 = vrot.lane.b32.xlu0 %v2708, 121
        %v2794 = vpop.permute.xlu0 %2793
        %2795 = vrot.lane.b32.xlu0 %v2709, 121
        %v2796 = vpop.permute.xlu0 %2795
        %2797 = vrot.lane.b32.xlu0 %v2710, 121
        %v2798 = vpop.permute.xlu0 %2797
        %2799 = vrot.lane.b32.xlu0 %v2711, 121
        %v2800 = vpop.permute.xlu0 %2799
        %2801 = vrot.lane.b32.xlu0 %v2712, 121
        %v2802 = vpop.permute.xlu0 %2801
        %vm2803 = vcmask 990208
        %v2804 = vsel %vm2803, %v2744, %v2746
        %v2805 = vsel %vm2803, %v2746, %v2748
        %v2806 = vsel %vm2803, %v2750, %v2752
        %v2807 = vsel %vm2803, %v2752, %v2754
        %v2808 = vsel %vm2803, %v2756, %v2758
        %v2809 = vsel %vm2803, %v2758, %v2760
        %v2810 = vsel %vm2803, %v2762, %v2764
        %v2811 = vsel %vm2803, %v2764, %v2766
        %v2812 = vsel %vm2803, %v2768, %v2770
        %v2813 = vsel %vm2803, %v2770, %v2772
        %v2814 = vsel %vm2803, %v2774, %v2776
        %v2815 = vsel %vm2803, %v2776, %v2778
        %v2816 = vsel %vm2803, %v2780, %v2782
        %v2817 = vsel %vm2803, %v2782, %v2784
        %v2818 = vsel %vm2803, %v2786, %v2788
        %v2819 = vsel %vm2803, %v2788, %v2790
        %v2820 = vsel %vm2803, %v2792, %v2794
        %v2821 = vsel %vm2803, %v2794, %v2796
        %v2822 = vsel %vm2803, %v2798, %v2800
        %v2823 = vsel %vm2803, %v2800, %v2802
        %v2854 = vadd.f32 %v2653, %v2744
        %v2855 = vadd.f32 %v2654, %v2804
        %v2856 = vadd.f32 %v2655, %v2805
        %v2857 = vadd.f32 %v2656, %v2750
        %v2858 = vadd.f32 %v2657, %v2806
        %v2859 = vadd.f32 %v2658, %v2807
        %v2860 = vadd.f32 %v2659, %v2756
        %v2861 = vadd.f32 %v2660, %v2808
        %v2862 = vadd.f32 %v2661, %v2809
        %v2863 = vadd.f32 %v2662, %v2762
        %v2864 = vadd.f32 %v2663, %v2810
        %v2865 = vadd.f32 %v2664, %v2811
        %v2866 = vadd.f32 %v2665, %v2768
        %v2867 = vadd.f32 %v2666, %v2812
        %v2868 = vadd.f32 %v2667, %v2813
        %v2869 = vadd.f32 %v2668, %v2774
        %v2870 = vadd.f32 %v2669, %v2814
        %v2871 = vadd.f32 %v2670, %v2815
        %v2872 = vadd.f32 %v2671, %v2780
        %v2873 = vadd.f32 %v2672, %v2816
        %v2874 = vadd.f32 %v2673, %v2817
        %v2875 = vadd.f32 %v2674, %v2786
        %v2876 = vadd.f32 %v2675, %v2818
        %v2877 = vadd.f32 %v2676, %v2819
        %v2878 = vadd.f32 %v2677, %v2792
        %v2879 = vadd.f32 %v2678, %v2820
        %v2880 = vadd.f32 %v2679, %v2821
        %v2881 = vadd.f32 %v2680, %v2798
        %v2882 = vadd.f32 %v2681, %v2822
        %v2883 = vadd.f32 %v2682, %v2823
        %2884 = vrot.lane.b32.xlu0 %v2683, 120
        %v2885 = vpop.permute.xlu0 %2884
        %2886 = vrot.lane.b32.xlu0 %v2684, 120
        %v2887 = vpop.permute.xlu0 %2886
        %2888 = vrot.lane.b32.xlu0 %v2685, 120
        %v2889 = vpop.permute.xlu0 %2888
        %2890 = vrot.lane.b32.xlu0 %v2686, 120
        %v2891 = vpop.permute.xlu0 %2890
        %2892 = vrot.lane.b32.xlu0 %v2687, 120
        %v2893 = vpop.permute.xlu0 %2892
        %2894 = vrot.lane.b32.xlu0 %v2688, 120
        %v2895 = vpop.permute.xlu0 %2894
        %2896 = vrot.lane.b32.xlu0 %v2689, 120
        %v2897 = vpop.permute.xlu0 %2896
        %2898 = vrot.lane.b32.xlu0 %v2690, 120
        %v2899 = vpop.permute.xlu0 %2898
        %2900 = vrot.lane.b32.xlu0 %v2691, 120
        %v2901 = vpop.permute.xlu0 %2900
        %2902 = vrot.lane.b32.xlu0 %v2692, 120
        %v2903 = vpop.permute.xlu0 %2902
        %2904 = vrot.lane.b32.xlu0 %v2693, 120
        %v2905 = vpop.permute.xlu0 %2904
        %2906 = vrot.lane.b32.xlu0 %v2694, 120
        %v2907 = vpop.permute.xlu0 %2906
        %2908 = vrot.lane.b32.xlu0 %v2695, 120
        %v2909 = vpop.permute.xlu0 %2908
        %2910 = vrot.lane.b32.xlu0 %v2696, 120
        %v2911 = vpop.permute.xlu0 %2910
        %2912 = vrot.lane.b32.xlu0 %v2697, 120
        %v2913 = vpop.permute.xlu0 %2912
        %2914 = vrot.lane.b32.xlu0 %v2698, 120
        %v2915 = vpop.permute.xlu0 %2914
        %2916 = vrot.lane.b32.xlu0 %v2699, 120
        %v2917 = vpop.permute.xlu0 %2916
        %2918 = vrot.lane.b32.xlu0 %v2700, 120
        %v2919 = vpop.permute.xlu0 %2918
        %2920 = vrot.lane.b32.xlu0 %v2701, 120
        %v2921 = vpop.permute.xlu0 %2920
        %2922 = vrot.lane.b32.xlu0 %v2702, 120
        %v2923 = vpop.permute.xlu0 %2922
        %2924 = vrot.lane.b32.xlu0 %v2703, 120
        %v2925 = vpop.permute.xlu0 %2924
        %2926 = vrot.lane.b32.xlu0 %v2704, 120
        %v2927 = vpop.permute.xlu0 %2926
        %2928 = vrot.lane.b32.xlu0 %v2705, 120
        %v2929 = vpop.permute.xlu0 %2928
        %2930 = vrot.lane.b32.xlu0 %v2706, 120
        %v2931 = vpop.permute.xlu0 %2930
        %2932 = vrot.lane.b32.xlu0 %v2707, 120
        %v2933 = vpop.permute.xlu0 %2932
        %2934 = vrot.lane.b32.xlu0 %v2708, 120
        %v2935 = vpop.permute.xlu0 %2934
        %2936 = vrot.lane.b32.xlu0 %v2709, 120
        %v2937 = vpop.permute.xlu0 %2936
        %2938 = vrot.lane.b32.xlu0 %v2710, 120
        %v2939 = vpop.permute.xlu0 %2938
        %2940 = vrot.lane.b32.xlu0 %v2711, 120
        %v2941 = vpop.permute.xlu0 %2940
        %2942 = vrot.lane.b32.xlu0 %v2712, 120
        %v2943 = vpop.permute.xlu0 %2942
        %vm2944 = vcmask 982016
        %v2945 = vsel %vm2944, %v2885, %v2887
        %v2946 = vsel %vm2944, %v2887, %v2889
        %v2947 = vsel %vm2944, %v2891, %v2893
        %v2948 = vsel %vm2944, %v2893, %v2895
        %v2949 = vsel %vm2944, %v2897, %v2899
        %v2950 = vsel %vm2944, %v2899, %v2901
        %v2951 = vsel %vm2944, %v2903, %v2905
        %v2952 = vsel %vm2944, %v2905, %v2907
        %v2953 = vsel %vm2944, %v2909, %v2911
        %v2954 = vsel %vm2944, %v2911, %v2913
        %v2955 = vsel %vm2944, %v2915, %v2917
        %v2956 = vsel %vm2944, %v2917, %v2919
        %v2957 = vsel %vm2944, %v2921, %v2923
        %v2958 = vsel %vm2944, %v2923, %v2925
        %v2959 = vsel %vm2944, %v2927, %v2929
        %v2960 = vsel %vm2944, %v2929, %v2931
        %v2961 = vsel %vm2944, %v2933, %v2935
        %v2962 = vsel %vm2944, %v2935, %v2937
        %v2963 = vsel %vm2944, %v2939, %v2941
        %v2964 = vsel %vm2944, %v2941, %v2943
        %v2995 = vadd.f32 %v2854, %v2885
        %v2996 = vadd.f32 %v2855, %v2945
        %v2997 = vadd.f32 %v2856, %v2946
        %v2998 = vadd.f32 %v2857, %v2891
        %v2999 = vadd.f32 %v2858, %v2947
        %v3000 = vadd.f32 %v2859, %v2948
        %v3001 = vadd.f32 %v2860, %v2897
        %v3002 = vadd.f32 %v2861, %v2949
        %v3003 = vadd.f32 %v2862, %v2950
        %v3004 = vadd.f32 %v2863, %v2903
        %v3005 = vadd.f32 %v2864, %v2951
        %v3006 = vadd.f32 %v2865, %v2952
        %v3007 = vadd.f32 %v2866, %v2909
        %v3008 = vadd.f32 %v2867, %v2953
        %v3009 = vadd.f32 %v2868, %v2954
        %v3010 = vadd.f32 %v2869, %v2915
        %v3011 = vadd.f32 %v2870, %v2955
        %v3012 = vadd.f32 %v2871, %v2956
        %v3013 = vadd.f32 %v2872, %v2921
        %v3014 = vadd.f32 %v2873, %v2957
        %v3015 = vadd.f32 %v2874, %v2958
        %v3016 = vadd.f32 %v2875, %v2927
        %v3017 = vadd.f32 %v2876, %v2959
        %v3018 = vadd.f32 %v2877, %v2960
        %v3019 = vadd.f32 %v2878, %v2933
        %v3020 = vadd.f32 %v2879, %v2961
        %v3021 = vadd.f32 %v2880, %v2962
        %v3022 = vadd.f32 %v2881, %v2939
        %v3023 = vadd.f32 %v2882, %v2963
        %v3024 = vadd.f32 %v2883, %v2964
        %3055 = vrot.lane.b32.xlu0 %v2995, 4
        %v3056 = vpop.permute.xlu0 %3055
        %3057 = vrot.lane.b32.xlu0 %v2996, 4
        %v3058 = vpop.permute.xlu0 %3057
        %3059 = vrot.lane.b32.xlu0 %v2997, 4
        %v3060 = vpop.permute.xlu0 %3059
        %3061 = vrot.lane.b32.xlu0 %v2998, 4
        %v3062 = vpop.permute.xlu0 %3061
        %3063 = vrot.lane.b32.xlu0 %v2999, 4
        %v3064 = vpop.permute.xlu0 %3063
        %3065 = vrot.lane.b32.xlu0 %v3000, 4
        %v3066 = vpop.permute.xlu0 %3065
        %3067 = vrot.lane.b32.xlu0 %v3001, 4
        %v3068 = vpop.permute.xlu0 %3067
        %3069 = vrot.lane.b32.xlu0 %v3002, 4
        %v3070 = vpop.permute.xlu0 %3069
        %3071 = vrot.lane.b32.xlu0 %v3003, 4
        %v3072 = vpop.permute.xlu0 %3071
        %3073 = vrot.lane.b32.xlu0 %v3004, 4
        %v3074 = vpop.permute.xlu0 %3073
        %3075 = vrot.lane.b32.xlu0 %v3005, 4
        %v3076 = vpop.permute.xlu0 %3075
        %3077 = vrot.lane.b32.xlu0 %v3006, 4
        %v3078 = vpop.permute.xlu0 %3077
        %3079 = vrot.lane.b32.xlu0 %v3007, 4
        %v3080 = vpop.permute.xlu0 %3079
        %3081 = vrot.lane.b32.xlu0 %v3008, 4
        %v3082 = vpop.permute.xlu0 %3081
        %3083 = vrot.lane.b32.xlu0 %v3009, 4
        %v3084 = vpop.permute.xlu0 %3083
        %3085 = vrot.lane.b32.xlu0 %v3010, 4
        %v3086 = vpop.permute.xlu0 %3085
        %3087 = vrot.lane.b32.xlu0 %v3011, 4
        %v3088 = vpop.permute.xlu0 %3087
        %3089 = vrot.lane.b32.xlu0 %v3012, 4
        %v3090 = vpop.permute.xlu0 %3089
        %3091 = vrot.lane.b32.xlu0 %v3013, 4
        %v3092 = vpop.permute.xlu0 %3091
        %3093 = vrot.lane.b32.xlu0 %v3014, 4
        %v3094 = vpop.permute.xlu0 %3093
        %3095 = vrot.lane.b32.xlu0 %v3015, 4
        %v3096 = vpop.permute.xlu0 %3095
        %3097 = vrot.lane.b32.xlu0 %v3016, 4
        %v3098 = vpop.permute.xlu0 %3097
        %3099 = vrot.lane.b32.xlu0 %v3017, 4
        %v3100 = vpop.permute.xlu0 %3099
        %3101 = vrot.lane.b32.xlu0 %v3018, 4
        %v3102 = vpop.permute.xlu0 %3101
        %3103 = vrot.lane.b32.xlu0 %v3019, 4
        %v3104 = vpop.permute.xlu0 %3103
        %3105 = vrot.lane.b32.xlu0 %v3020, 4
        %v3106 = vpop.permute.xlu0 %3105
        %3107 = vrot.lane.b32.xlu0 %v3021, 4
        %v3108 = vpop.permute.xlu0 %3107
        %3109 = vrot.lane.b32.xlu0 %v3022, 4
        %v3110 = vpop.permute.xlu0 %3109
        %3111 = vrot.lane.b32.xlu0 %v3023, 4
        %v3112 = vpop.permute.xlu0 %3111
        %3113 = vrot.lane.b32.xlu0 %v3024, 4
        %v3114 = vpop.permute.xlu0 %3113
        %vm3115 = vcmask 31744
        %v3116 = vsel %vm3115, %v3056, %v3058
        %v3117 = vsel %vm3115, %v3058, %v3060
        %v3118 = vsel %vm3115, %v3062, %v3064
        %v3119 = vsel %vm3115, %v3064, %v3066
        %v3120 = vsel %vm3115, %v3068, %v3070
        %v3121 = vsel %vm3115, %v3070, %v3072
        %v3122 = vsel %vm3115, %v3074, %v3076
        %v3123 = vsel %vm3115, %v3076, %v3078
        %v3124 = vsel %vm3115, %v3080, %v3082
        %v3125 = vsel %vm3115, %v3082, %v3084
        %v3126 = vsel %vm3115, %v3086, %v3088
        %v3127 = vsel %vm3115, %v3088, %v3090
        %v3128 = vsel %vm3115, %v3092, %v3094
        %v3129 = vsel %vm3115, %v3094, %v3096
        %v3130 = vsel %vm3115, %v3098, %v3100
        %v3131 = vsel %vm3115, %v3100, %v3102
        %v3132 = vsel %vm3115, %v3104, %v3106
        %v3133 = vsel %vm3115, %v3106, %v3108
        %v3134 = vsel %vm3115, %v3110, %v3112
        %v3135 = vsel %vm3115, %v3112, %v3114
        %s3156 = scalar_lea.vmem %s458, 320 [#allocation6]
        %3157 = vst [vmem:[%s3156] sm:$0xff] %v3116
        %3158 = vst [vmem:[%s3156 + $0x8] sm:$0xff] %v3117
        %3159 = vst [vmem:[%s3156 + $0x10] sm:$0xff] %v3118
        %3160 = vst [vmem:[%s3156 + $0x18] sm:$0xff] %v3119
        %3161 = vst [vmem:[%s3156 + $0x20] sm:$0xff] %v3120
        %3162 = vst [vmem:[%s3156 + $0x28] sm:$0xff] %v3121
        %3163 = vst [vmem:[%s3156 + $0x30] sm:$0xff] %v3122
        %3164 = vst [vmem:[%s3156 + $0x38] sm:$0xff] %v3123
        %3165 = vst [vmem:[%s3156 + $0x40] sm:$0xff] %v3124
        %3166 = vst [vmem:[%s3156 + $0x48] sm:$0xff] %v3125
        %3167 = vst [vmem:[%s3156 + $0x50] sm:$0xff] %v3126
        %3168 = vst [vmem:[%s3156 + $0x58] sm:$0xff] %v3127
        %3169 = vst [vmem:[%s3156 + $0x60] sm:$0xff] %v3128
        %3170 = vst [vmem:[%s3156 + $0x68] sm:$0xff] %v3129
        %3171 = vst [vmem:[%s3156 + $0x70] sm:$0xff] %v3130
        %3172 = vst [vmem:[%s3156 + $0x78] sm:$0xff] %v3131
        %3173 = vst [vmem:[%s3156 + $0x80] sm:$0xff] %v3132
        %3174 = vst [vmem:[%s3156 + $0x88] sm:$0xff] %v3133
        %3175 = vst [vmem:[%s3156 + $0x90] sm:$0xff] %v3134
        %3176 = vst [vmem:[%s3156 + $0x98] sm:$0xff] %v3135
        %s3177 = sand.u32 %s139, 1
        %s3178 = scalar_lea.sflag [#allocation7], %s3177
        %s3179 = sand.u32 %s139, 1
        %s3180 = smul.addr %s3179, 480
        %s3181 = scalar_lea.vmem [#allocation6], %s3180
        // Predicated region
        $region148: #{delta_forward.1} parent=118 // pred_check
          %p3182 = pneg %p149
        $region149: #{delta_forward.1} parent=118 // pred_check_branch
          %3184 = sbr.rel (%p3182) target = $region151
        $region150: #{delta_forward.1} parent=118 // pred_region
          %s3185 = smul.u32 2, %s22
          %s3187 = ssub.s32 7680, 7680
          %3188 = vsyncadd %s3178, %s3187
          %s3189 = smul.addr %s21, 480
          %s3190 = sadd.s32 %s3185, %s3189
          %s3191 = smul.addr %s3190, 128
          %s3192 = scalar_lea.hbm %s3, %s3191
          %s3193 = sshll.u32 %s3181, 4
          %s3194 = int_to_ptr.vmem [resolvable:$true] %s3193
          %3199 = dma.vmem_to_hbm [thread:$0]  %s3194, 7680, %s3192, %s3178, 256, 2048, 16
        $region151: #{delta_forward.1} parent=118 // pred_fallthru
          _
      $region119: #{delta_forward.1} parent=5 // pred_fallthru
        _
      %p3200 = scmp.le.s32.totalorder 2, %s12
      // Predicated region
      $region152: #{delta_forward.1} parent=5 // pred_check
        %p3201 = pneg %p3200
      $region153: #{delta_forward.1} parent=5 // pred_check_branch
        %3203 = sbr.rel (%p3201) target = $region155
      $region154: #{delta_forward.1} parent=5 // pred_region
        %s3204 = ssub.s32 %s12, 2
        // Predicated region
        $region156: #{delta_forward.1} parent=154 // pred_check
          %p3205 = pneg %p155
        $region157: #{delta_forward.1} parent=154 // pred_check_branch
          %3207 = sbr.rel (%p3205) target = $region159
        $region158: #{delta_forward.1} parent=154 // pred_region
          %s3208 = sand.u32 %s140, 1
          %s3209 = scalar_lea.sflag [#allocation7], %s3208
          %s3210 = sand.u32 %s140, 1
          %s3211 = smul.addr %s3210, 480
          %s3212 = scalar_lea.vmem [#allocation6], %s3211
          %3213 = dma.done %s3209, 7680
        $region159: #{delta_forward.1} parent=154 // pred_fallthru
          _
      $region155: #{delta_forward.1} parent=5 // pred_fallthru
        _
    $region6: #{delta_forward.1} parent=1 // loop_footer
      %s16 = sadd.s32 1, %s12
    $region7: #{delta_forward.1} parent=1 // loop_footer_branch
      %11 = sbr.rel target = $region3
    $region8: #{delta_forward.1} parent=1 // loop_exit
      _
    %3214 = vsyncpa [#allocation7], 1
    %s3215 = scalar_lea.sflag [#allocation7], 1
    %3216 = vsyncpa %s3215, 1

</llo_original>
